<compile_context>
chip_gen: v7x
topology: tpu7x:2x2x1
jax: 0.10.0
libtpu: 0.0.40
codegen_flags: <defaults>
</compile_context>

<pallas_src>
import jax
import jax.numpy as jnp
from jax.experimental import pallas as pl
from jax.experimental.pallas import tpu as pltpu


def feedforward_kernel(x_ref,
                       w1_ref, b1_ref,
                       w2_ref, b2_ref,
                       w3_ref, b3_ref,
                       w4_ref, b4_ref,
                       o_ref):
    """Fused 4-layer MLP + ReLU + log_softmax for one batch tile.

    x_ref : (tb, 6)   batch-major input block
    w*_ref: (in, out) pre-transposed weights (VMEM-resident)
    b*_ref: (1, out)  biases, broadcast over the batch (sublane) axis
    o_ref : (tb, 3)   batch-major log-probabilities
    """
    h = x_ref[...]                                                      # (tb, 6) f32

    h = jnp.maximum(jnp.dot(h, w1_ref[...],
                            preferred_element_type=jnp.float32) + b1_ref[...], 0.0)
    h = jnp.maximum(jnp.dot(h, w2_ref[...],
                            preferred_element_type=jnp.float32) + b2_ref[...], 0.0)
    h = jnp.maximum(jnp.dot(h, w3_ref[...],
                            preferred_element_type=jnp.float32) + b3_ref[...], 0.0)
    h = jnp.maximum(jnp.dot(h, w4_ref[...],
                            preferred_element_type=jnp.float32) + b4_ref[...], 0.0)

    # Numerically stable log_softmax over the class axis (3 lanes).  exp/log
    # land on the EUP slot, the tiny cross-lane reduces on the XLU -- both
    # hidden under the DMA stream.
    m = jnp.max(h, axis=-1, keepdims=True)
    s = h - m
    lse = jnp.log(jnp.sum(jnp.exp(s), axis=-1, keepdims=True))
    o_ref[...] = (s - lse).astype(o_ref.dtype)


def feedforward(x, params, *, tb=4096):
    """x: [B, 6] float32.  params: PyTorch-convention (out,in) weights, (out,) biases.

    Returns [B, 3] log-probabilities, matching the nn.Module forward pass.
    """
    B, Din = x.shape
    assert Din == 6
    x = x.astype(jnp.float32)

    # Tile selection: batch tiles are multiples of 128 (8-aligned sublanes);
    # cap at round_up(ceil(B/2), 128) so there are >= 2 grid steps (keeps both
    # v7x TensorCores busy under dimension_semantics=("parallel",)).
    half = -(-((B + 1) // 2) // 128) * 128            # round_up(ceil(B/2), 128)
    tb = max(128, min(tb, half))
    num_tiles = pl.cdiv(B, tb)                        # ragged last block is fine

    # PyTorch (out, in) weights -> (in, out); biases -> (1, out).  Done once
    # on a few KB so it is negligible; keeps every in-kernel dot a plain
    # (tb, K) @ (K, N) MXU matmul with no in-kernel transposes.
    wts = []
    for i in range(1, 5):
        wts.append(params[f"w{i}"].T.astype(jnp.float32))
        wts.append(params[f"b{i}"].reshape(1, -1).astype(jnp.float32))

    # Constant-index full blocks: DMA'd once, stay resident in VMEM.
    const = lambda a: pl.BlockSpec(a.shape, lambda i: (0, 0))

    out = pl.pallas_call(
        feedforward_kernel,
        out_shape=jax.ShapeDtypeStruct((B, 3), jnp.float32),
        grid=(num_tiles,),
        in_specs=[pl.BlockSpec((tb, Din), lambda i: (i, 0))]
                + [const(a) for a in wts],
        out_specs=pl.BlockSpec((tb, 3), lambda i: (i, 0)),
        compiler_params=pltpu.CompilerParams(
            dimension_semantics=("parallel",)),
    )(x, *wts)
    return out


def init_params(key):
    """Deterministic init; PyTorch nn.Linear convention: weight (out,in), bias (out,)."""
    dims = [(64, 6), (32, 64), (10, 32), (3, 10)]
    params = {}
    keys = jax.random.split(key, 2 * len(dims))
    for idx, (out_d, in_d) in enumerate(dims):
        bound = 1.0 / (in_d ** 0.5)  # same scale as PyTorch's default uniform init
        params[f"w{idx + 1}"] = jax.random.uniform(
            keys[2 * idx], (out_d, in_d), jnp.float32, -bound, bound)
        params[f"b{idx + 1}"] = jax.random.uniform(
            keys[2 * idx + 1], (out_d,), jnp.float32, -bound, bound)
    return params


def feedforward_ref(x, params):
    h = x
    for i in range(1, 5):
        h = jnp.maximum(h @ params[f"w{i}"].T + params[f"b{i}"], 0.0)
    return jax.nn.log_softmax(h, axis=1)


if __name__ == "__main__":
    key = jax.random.PRNGKey(0)
    kx, kp = jax.random.split(key)
    B = 300  # small, non-multiple of 128: exercises the ragged-last-block path
    x = jax.random.normal(kx, (B, 6), dtype=jnp.float32)
    params = init_params(kp)

    out = jax.block_until_ready(feedforward(x, params))

    ref = feedforward_ref(x, params)
    assert out.shape == (B, 3)
    assert jnp.allclose(out, ref, atol=1e-5, rtol=1e-5), "mismatch vs JAX reference"
    print("KERNEL_OK")
</pallas_src>

<mosaic_0001>
module attributes {stable_mosaic.version = 11 : i64} {
  func.func @feedforward_kernel(%arg0: i32, %arg1: memref<256x6xf32, #tpu.memory_space<vmem>>, %arg2: memref<6x64xf32, #tpu.memory_space<vmem>>, %arg3: memref<1x64xf32, #tpu.memory_space<vmem>>, %arg4: memref<64x32xf32, #tpu.memory_space<vmem>>, %arg5: memref<1x32xf32, #tpu.memory_space<vmem>>, %arg6: memref<32x10xf32, #tpu.memory_space<vmem>>, %arg7: memref<1x10xf32, #tpu.memory_space<vmem>>, %arg8: memref<10x3xf32, #tpu.memory_space<vmem>>, %arg9: memref<1x3xf32, #tpu.memory_space<vmem>>, %arg10: memref<256x3xf32, #tpu.memory_space<vmem>>) attributes {dimension_semantics = [#tpu.dimension_semantics<parallel>], iteration_bounds = array<i64: 2>, scalar_prefetch = 0 : i64, scratch_operands = 0 : i64, tpu.core_type = #tpu.core_type<tc>, window_params = [{transform_indices = @transform_0, window_bounds = array<i64: 256, 6>}, {pipeline_mode = #tpu.pipeline_mode<synchronous>, transform_indices = @transform_1, window_bounds = array<i64: 6, 64>}, {pipeline_mode = #tpu.pipeline_mode<synchronous>, transform_indices = @transform_2, window_bounds = array<i64: 1, 64>}, {pipeline_mode = #tpu.pipeline_mode<synchronous>, transform_indices = @transform_3, window_bounds = array<i64: 64, 32>}, {pipeline_mode = #tpu.pipeline_mode<synchronous>, transform_indices = @transform_4, window_bounds = array<i64: 1, 32>}, {pipeline_mode = #tpu.pipeline_mode<synchronous>, transform_indices = @transform_5, window_bounds = array<i64: 32, 10>}, {pipeline_mode = #tpu.pipeline_mode<synchronous>, transform_indices = @transform_6, window_bounds = array<i64: 1, 10>}, {pipeline_mode = #tpu.pipeline_mode<synchronous>, transform_indices = @transform_7, window_bounds = array<i64: 10, 3>}, {pipeline_mode = #tpu.pipeline_mode<synchronous>, transform_indices = @transform_8, window_bounds = array<i64: 1, 3>}, {transform_indices = @transform_9, window_bounds = array<i64: 256, 3>}]} {
    %c0 = arith.constant 0 : index
    %c0_0 = arith.constant 0 : index
    %0 = vector.load %arg1[%c0, %c0_0] : memref<256x6xf32, #tpu.memory_space<vmem>>, vector<256x6xf32>
    %c0_1 = arith.constant 0 : index
    %c0_2 = arith.constant 0 : index
    %1 = vector.load %arg2[%c0_1, %c0_2] : memref<6x64xf32, #tpu.memory_space<vmem>>, vector<6x64xf32>
    %cst = arith.constant dense<0.000000e+00> : vector<256x64xf32>
    %2 = tpu.matmul %0, %1, %cst {dimension_numbers = #tpu.dot_dimension_numbers<[1], [0], [0], [1], [0, 0, 1, 1], [], []>} : vector<256x6xf32>, vector<6x64xf32>, vector<256x64xf32> -> vector<256x64xf32>
    %c0_3 = arith.constant 0 : index
    %c0_4 = arith.constant 0 : index
    %3 = vector.load %arg3[%c0_3, %c0_4] : memref<1x64xf32, #tpu.memory_space<vmem>>, vector<1x64xf32>
    %4 = vector.broadcast %3 : vector<1x64xf32> to vector<256x64xf32>
    %5 = arith.addf %2, %4 : vector<256x64xf32>
    %cst_5 = arith.constant 0.000000e+00 : f32
    %6 = vector.broadcast %cst_5 : f32 to vector<256x64xf32>
    %7 = arith.maximumf %5, %6 : vector<256x64xf32>
    %c0_6 = arith.constant 0 : index
    %c0_7 = arith.constant 0 : index
    %8 = vector.load %arg4[%c0_6, %c0_7] : memref<64x32xf32, #tpu.memory_space<vmem>>, vector<64x32xf32>
    %cst_8 = arith.constant dense<0.000000e+00> : vector<256x32xf32>
    %9 = tpu.matmul %7, %8, %cst_8 {dimension_numbers = #tpu.dot_dimension_numbers<[1], [0], [0], [1], [0, 0, 1, 1], [], []>} : vector<256x64xf32>, vector<64x32xf32>, vector<256x32xf32> -> vector<256x32xf32>
    %c0_9 = arith.constant 0 : index
    %c0_10 = arith.constant 0 : index
    %10 = vector.load %arg5[%c0_9, %c0_10] : memref<1x32xf32, #tpu.memory_space<vmem>>, vector<1x32xf32>
    %11 = vector.broadcast %10 : vector<1x32xf32> to vector<256x32xf32>
    %12 = arith.addf %9, %11 : vector<256x32xf32>
    %cst_11 = arith.constant 0.000000e+00 : f32
    %13 = vector.broadcast %cst_11 : f32 to vector<256x32xf32>
    %14 = arith.maximumf %12, %13 : vector<256x32xf32>
    %c0_12 = arith.constant 0 : index
    %c0_13 = arith.constant 0 : index
    %15 = vector.load %arg6[%c0_12, %c0_13] : memref<32x10xf32, #tpu.memory_space<vmem>>, vector<32x10xf32>
    %cst_14 = arith.constant dense<0.000000e+00> : vector<256x10xf32>
    %16 = tpu.matmul %14, %15, %cst_14 {dimension_numbers = #tpu.dot_dimension_numbers<[1], [0], [0], [1], [0, 0, 1, 1], [], []>} : vector<256x32xf32>, vector<32x10xf32>, vector<256x10xf32> -> vector<256x10xf32>
    %c0_15 = arith.constant 0 : index
    %c0_16 = arith.constant 0 : index
    %17 = vector.load %arg7[%c0_15, %c0_16] : memref<1x10xf32, #tpu.memory_space<vmem>>, vector<1x10xf32>
    %18 = vector.broadcast %17 : vector<1x10xf32> to vector<256x10xf32>
    %19 = arith.addf %16, %18 : vector<256x10xf32>
    %cst_17 = arith.constant 0.000000e+00 : f32
    %20 = vector.broadcast %cst_17 : f32 to vector<256x10xf32>
    %21 = arith.maximumf %19, %20 : vector<256x10xf32>
    %c0_18 = arith.constant 0 : index
    %c0_19 = arith.constant 0 : index
    %22 = vector.load %arg8[%c0_18, %c0_19] : memref<10x3xf32, #tpu.memory_space<vmem>>, vector<10x3xf32>
    %cst_20 = arith.constant dense<0.000000e+00> : vector<256x3xf32>
    %23 = tpu.matmul %21, %22, %cst_20 {dimension_numbers = #tpu.dot_dimension_numbers<[1], [0], [0], [1], [0, 0, 1, 1], [], []>} : vector<256x10xf32>, vector<10x3xf32>, vector<256x3xf32> -> vector<256x3xf32>
    %c0_21 = arith.constant 0 : index
    %c0_22 = arith.constant 0 : index
    %24 = vector.load %arg9[%c0_21, %c0_22] : memref<1x3xf32, #tpu.memory_space<vmem>>, vector<1x3xf32>
    %25 = vector.broadcast %24 : vector<1x3xf32> to vector<256x3xf32>
    %26 = arith.addf %23, %25 : vector<256x3xf32>
    %cst_23 = arith.constant 0.000000e+00 : f32
    %27 = vector.broadcast %cst_23 : f32 to vector<256x3xf32>
    %28 = arith.maximumf %26, %27 : vector<256x3xf32>
    %cst_24 = arith.constant dense<0xFF800000> : vector<256xf32>
    %29 = vector.multi_reduction <maximumf>, %28, %cst_24 [1] : vector<256x3xf32> to vector<256xf32>
    %30 = vector.shape_cast %29 : vector<256xf32> to vector<256x1xf32>
    %31 = vector.broadcast %30 : vector<256x1xf32> to vector<256x3xf32>
    %32 = arith.subf %28, %31 : vector<256x3xf32>
    %33 = math.exp %32 : vector<256x3xf32>
    %cst_25 = arith.constant dense<0.000000e+00> : vector<256xf32>
    %34 = vector.multi_reduction <add>, %33, %cst_25 [1] : vector<256x3xf32> to vector<256xf32>
    %35 = vector.shape_cast %34 : vector<256xf32> to vector<256x1xf32>
    %36 = math.log %35 : vector<256x1xf32>
    %37 = vector.broadcast %36 : vector<256x1xf32> to vector<256x3xf32>
    %38 = arith.subf %32, %37 : vector<256x3xf32>
    %c0_26 = arith.constant 0 : index
    %c0_27 = arith.constant 0 : index
    %39 = vector.load %arg10[%c0_26, %c0_27] : memref<256x3xf32, #tpu.memory_space<vmem>>, vector<256x3xf32>
    tpu.vector_store %arg10[%c0_26, %c0_27], %38 {strides = array<i32>} : memref<256x3xf32, #tpu.memory_space<vmem>>, vector<256x3xf32>,
    return
  }
  func.func @transform_0(%arg0: i32) -> (i32, i32) {
    %c0_i32 = arith.constant 0 : i32
    %c0_i32_0 = arith.constant 0 : i32
    return %arg0, %c0_i32 : i32, i32
  }
  func.func @transform_1(%arg0: i32) -> (i32, i32) {
    %c0_i32 = arith.constant 0 : i32
    %c0_i32_0 = arith.constant 0 : i32
    %c0_i32_1 = arith.constant 0 : i32
    return %c0_i32, %c0_i32_0 : i32, i32
  }
  func.func @transform_2(%arg0: i32) -> (i32, i32) {
    %c0_i32 = arith.constant 0 : i32
    %c0_i32_0 = arith.constant 0 : i32
    %c0_i32_1 = arith.constant 0 : i32
    return %c0_i32, %c0_i32_0 : i32, i32
  }
  func.func @transform_3(%arg0: i32) -> (i32, i32) {
    %c0_i32 = arith.constant 0 : i32
    %c0_i32_0 = arith.constant 0 : i32
    %c0_i32_1 = arith.constant 0 : i32
    return %c0_i32, %c0_i32_0 : i32, i32
  }
  func.func @transform_4(%arg0: i32) -> (i32, i32) {
    %c0_i32 = arith.constant 0 : i32
    %c0_i32_0 = arith.constant 0 : i32
    %c0_i32_1 = arith.constant 0 : i32
    return %c0_i32, %c0_i32_0 : i32, i32
  }
  func.func @transform_5(%arg0: i32) -> (i32, i32) {
    %c0_i32 = arith.constant 0 : i32
    %c0_i32_0 = arith.constant 0 : i32
    %c0_i32_1 = arith.constant 0 : i32
    return %c0_i32, %c0_i32_0 : i32, i32
  }
  func.func @transform_6(%arg0: i32) -> (i32, i32) {
    %c0_i32 = arith.constant 0 : i32
    %c0_i32_0 = arith.constant 0 : i32
    %c0_i32_1 = arith.constant 0 : i32
    return %c0_i32, %c0_i32_0 : i32, i32
  }
  func.func @transform_7(%arg0: i32) -> (i32, i32) {
    %c0_i32 = arith.constant 0 : i32
    %c0_i32_0 = arith.constant 0 : i32
    %c0_i32_1 = arith.constant 0 : i32
    return %c0_i32, %c0_i32_0 : i32, i32
  }
  func.func @transform_8(%arg0: i32) -> (i32, i32) {
    %c0_i32 = arith.constant 0 : i32
    %c0_i32_0 = arith.constant 0 : i32
    %c0_i32_1 = arith.constant 0 : i32
    return %c0_i32, %c0_i32_0 : i32, i32
  }
  func.func @transform_9(%arg0: i32) -> (i32, i32) {
    %c0_i32 = arith.constant 0 : i32
    %c0_i32_0 = arith.constant 0 : i32
    return %arg0, %c0_i32 : i32, i32
  }
}

</mosaic_0001>

<llo_original>
// kernel: tpu_custom_call.1
$region0: #{tpu_custom_call.1}
  #allocation0 [shape = 'u32[]', space=smem, size = 0x4, offset = 0x4, fixed_abs, tag = 'smem constant byte address 0x4 - core index']
  #allocation1 [shape = 'u32[144,128]{1,0:T(1,128)}', space=vmem, size = 0x12000, scoped, tag = 'internal scratch']
  %s0 = inlined_call_operand.vmem [shape: f32[300,6], index: 0, kind: input, shape index: {}]
  %s1 = inlined_call_operand.vmem [shape: f32[6,64], index: 1, kind: input, shape index: {}]
  %s2 = inlined_call_operand.vmem [shape: f32[1,64], index: 2, kind: input, shape index: {}]
  %s3 = inlined_call_operand.vmem [shape: f32[64,32], index: 3, kind: input, shape index: {}]
  %s4 = inlined_call_operand.vmem [shape: f32[1,32], index: 4, kind: input, shape index: {}]
  %s5 = inlined_call_operand.vmem [shape: f32[32,10], index: 5, kind: input, shape index: {}]
  %s6 = inlined_call_operand.vmem [shape: f32[1,10], index: 6, kind: input, shape index: {}]
  %s7 = inlined_call_operand.vmem [shape: f32[10,3], index: 7, kind: input, shape index: {}]
  %s8 = inlined_call_operand.vmem [shape: f32[1,3], index: 8, kind: input, shape index: {}]
  %s9 = inlined_call_operand.vmem [shape: f32[300,3], index: 9, kind: output, shape index: {}]
  %s10 = sld [smem:[#allocation0]]
  $region117: #{tpu_custom_call.1} parent=0
    _
  %s12 = ssub.s32 1, %s10
  %s13 = scalar_select 0, %s12, %s10
  $region1: #{tpu_custom_call.1} parent=0
    #allocation2 [shape = 'u8[262144]{0}', space=vmem, size = 0x40000, scoped, tag = 'output window, operand 0']
    loop: start=0, step=1, limit=4
    $region2: #{tpu_custom_call.1} parent=1 // loop_pre_header
      _
    $region3: #{tpu_custom_call.1} parent=1 // loop_header
      %s15 = sphi 0, %s19
      %p16 = scmp.ge.s32.totalorder %s15, 4
      %s25 = sphi 0, %s27
      %s28 = sphi 0, %s25
      %s29 = sphi 0, %s28
      %s45 = sphi 0, %s29
      %s49 = sphi 0, %s49
      %s51 = sphi 0, %s49
      %s52 = sphi 0, %s51
      %s66 = sphi 0, %s52
      %s70 = sphi 0, %s70
      %s72 = sphi 0, %s70
      %s73 = sphi 0, %s72
      %s87 = sphi 0, %s73
      %s91 = sphi 0, %s91
      %s93 = sphi 0, %s91
      %s94 = sphi 0, %s93
      %s108 = sphi 0, %s94
      %s112 = sphi 0, %s112
      %s114 = sphi 0, %s112
      %s115 = sphi 0, %s114
      %s129 = sphi 0, %s115
      %s133 = sphi 0, %s133
      %s135 = sphi 0, %s133
      %s136 = sphi 0, %s135
      %s150 = sphi 0, %s136
      %s154 = sphi 0, %s154
      %s156 = sphi 0, %s154
      %s157 = sphi 0, %s156
      %s171 = sphi 0, %s157
      %s175 = sphi 0, %s175
      %s177 = sphi 0, %s175
      %s178 = sphi 0, %s177
      %s192 = sphi 0, %s178
      %s196 = sphi 0, %s196
      %s198 = sphi 0, %s196
      %s199 = sphi 0, %s198
      %s213 = sphi 0, %s199
      %s219 = sphi 0, %s221
      %s222 = sphi 0, %s219
      %s223 = sphi 0, %s222
      %s239 = sphi 0, %s223
    $region4: #{tpu_custom_call.1} parent=1 // loop_header_branch
      %18 = sbr.rel (%p16) target = $region8
    $region5: #{tpu_custom_call.1} parent=1 // loop_body
      %s20 = ssub.s32 %s15, 1
      %s21 = ssub.s32 %s15, 2
      %s22 = sadd.s32 %s15, 1
      %s23 = ssub.s32 %s15, %s22
      %p24 = scmp.eq.s32.totalorder %s23, 0
      %s26 = sadd.s32 %s25, 1
      %s27 = scalar_select %p24, %s25, %s26
      %p30 = pneg %p24
      %p31 = scmp.eq.s32.totalorder %s15, 1
      %p32 = por %p30, %p31
      %p33 = scmp.ne.s32.totalorder %s25, %s28
      %p34 = scmp.eq.s32.totalorder %s15, 0
      %p35 = por %p33, %p34
      %p36 = scmp.ne.s32.totalorder %s25, %s28
      %p37 = scmp.eq.s32.totalorder %s20, 1
      %p38 = por %p36, %p37
      %p39 = scmp.ne.s32.totalorder %s28, %s29
      %p40 = scmp.eq.s32.totalorder %s20, 0
      %p41 = por %p39, %p40
      %p42 = scmp.ne.s32.totalorder %s28, %s29
      %p43 = scmp.eq.s32.totalorder %s21, 1
      %p44 = por %p42, %p43
      %p46 = scmp.ne.s32.totalorder %s29, %s45
      %p47 = scmp.eq.s32.totalorder %s21, 0
      %p48 = por %p46, %p47
      %s50 = sadd.s32 %s49, 1
      %p53 = scmp.eq.s32.totalorder %s15, 1
      %p54 = scmp.ne.s32.totalorder %s49, %s51
      %p55 = scmp.eq.s32.totalorder %s15, 0
      %p56 = por %p54, %p55
      %p57 = scmp.ne.s32.totalorder %s49, %s51
      %p58 = scmp.eq.s32.totalorder %s20, 1
      %p59 = por %p57, %p58
      %p60 = scmp.ne.s32.totalorder %s51, %s52
      %p61 = scmp.eq.s32.totalorder %s20, 0
      %p62 = por %p60, %p61
      %p63 = scmp.ne.s32.totalorder %s51, %s52
      %p64 = scmp.eq.s32.totalorder %s21, 1
      %p65 = por %p63, %p64
      %p67 = scmp.ne.s32.totalorder %s52, %s66
      %p68 = scmp.eq.s32.totalorder %s21, 0
      %p69 = por %p67, %p68
      %s71 = sadd.s32 %s70, 1
      %p74 = scmp.eq.s32.totalorder %s15, 1
      %p75 = scmp.ne.s32.totalorder %s70, %s72
      %p76 = scmp.eq.s32.totalorder %s15, 0
      %p77 = por %p75, %p76
      %p78 = scmp.ne.s32.totalorder %s70, %s72
      %p79 = scmp.eq.s32.totalorder %s20, 1
      %p80 = por %p78, %p79
      %p81 = scmp.ne.s32.totalorder %s72, %s73
      %p82 = scmp.eq.s32.totalorder %s20, 0
      %p83 = por %p81, %p82
      %p84 = scmp.ne.s32.totalorder %s72, %s73
      %p85 = scmp.eq.s32.totalorder %s21, 1
      %p86 = por %p84, %p85
      %p88 = scmp.ne.s32.totalorder %s73, %s87
      %p89 = scmp.eq.s32.totalorder %s21, 0
      %p90 = por %p88, %p89
      %s92 = sadd.s32 %s91, 1
      %p95 = scmp.eq.s32.totalorder %s15, 1
      %p96 = scmp.ne.s32.totalorder %s91, %s93
      %p97 = scmp.eq.s32.totalorder %s15, 0
      %p98 = por %p96, %p97
      %p99 = scmp.ne.s32.totalorder %s91, %s93
      %p100 = scmp.eq.s32.totalorder %s20, 1
      %p101 = por %p99, %p100
      %p102 = scmp.ne.s32.totalorder %s93, %s94
      %p103 = scmp.eq.s32.totalorder %s20, 0
      %p104 = por %p102, %p103
      %p105 = scmp.ne.s32.totalorder %s93, %s94
      %p106 = scmp.eq.s32.totalorder %s21, 1
      %p107 = por %p105, %p106
      %p109 = scmp.ne.s32.totalorder %s94, %s108
      %p110 = scmp.eq.s32.totalorder %s21, 0
      %p111 = por %p109, %p110
      %s113 = sadd.s32 %s112, 1
      %p116 = scmp.eq.s32.totalorder %s15, 1
      %p117 = scmp.ne.s32.totalorder %s112, %s114
      %p118 = scmp.eq.s32.totalorder %s15, 0
      %p119 = por %p117, %p118
      %p120 = scmp.ne.s32.totalorder %s112, %s114
      %p121 = scmp.eq.s32.totalorder %s20, 1
      %p122 = por %p120, %p121
      %p123 = scmp.ne.s32.totalorder %s114, %s115
      %p124 = scmp.eq.s32.totalorder %s20, 0
      %p125 = por %p123, %p124
      %p126 = scmp.ne.s32.totalorder %s114, %s115
      %p127 = scmp.eq.s32.totalorder %s21, 1
      %p128 = por %p126, %p127
      %p130 = scmp.ne.s32.totalorder %s115, %s129
      %p131 = scmp.eq.s32.totalorder %s21, 0
      %p132 = por %p130, %p131
      %s134 = sadd.s32 %s133, 1
      %p137 = scmp.eq.s32.totalorder %s15, 1
      %p138 = scmp.ne.s32.totalorder %s133, %s135
      %p139 = scmp.eq.s32.totalorder %s15, 0
      %p140 = por %p138, %p139
      %p141 = scmp.ne.s32.totalorder %s133, %s135
      %p142 = scmp.eq.s32.totalorder %s20, 1
      %p143 = por %p141, %p142
      %p144 = scmp.ne.s32.totalorder %s135, %s136
      %p145 = scmp.eq.s32.totalorder %s20, 0
      %p146 = por %p144, %p145
      %p147 = scmp.ne.s32.totalorder %s135, %s136
      %p148 = scmp.eq.s32.totalorder %s21, 1
      %p149 = por %p147, %p148
      %p151 = scmp.ne.s32.totalorder %s136, %s150
      %p152 = scmp.eq.s32.totalorder %s21, 0
      %p153 = por %p151, %p152
      %s155 = sadd.s32 %s154, 1
      %p158 = scmp.eq.s32.totalorder %s15, 1
      %p159 = scmp.ne.s32.totalorder %s154, %s156
      %p160 = scmp.eq.s32.totalorder %s15, 0
      %p161 = por %p159, %p160
      %p162 = scmp.ne.s32.totalorder %s154, %s156
      %p163 = scmp.eq.s32.totalorder %s20, 1
      %p164 = por %p162, %p163
      %p165 = scmp.ne.s32.totalorder %s156, %s157
      %p166 = scmp.eq.s32.totalorder %s20, 0
      %p167 = por %p165, %p166
      %p168 = scmp.ne.s32.totalorder %s156, %s157
      %p169 = scmp.eq.s32.totalorder %s21, 1
      %p170 = por %p168, %p169
      %p172 = scmp.ne.s32.totalorder %s157, %s171
      %p173 = scmp.eq.s32.totalorder %s21, 0
      %p174 = por %p172, %p173
      %s176 = sadd.s32 %s175, 1
      %p179 = scmp.eq.s32.totalorder %s15, 1
      %p180 = scmp.ne.s32.totalorder %s175, %s177
      %p181 = scmp.eq.s32.totalorder %s15, 0
      %p182 = por %p180, %p181
      %p183 = scmp.ne.s32.totalorder %s175, %s177
      %p184 = scmp.eq.s32.totalorder %s20, 1
      %p185 = por %p183, %p184
      %p186 = scmp.ne.s32.totalorder %s177, %s178
      %p187 = scmp.eq.s32.totalorder %s20, 0
      %p188 = por %p186, %p187
      %p189 = scmp.ne.s32.totalorder %s177, %s178
      %p190 = scmp.eq.s32.totalorder %s21, 1
      %p191 = por %p189, %p190
      %p193 = scmp.ne.s32.totalorder %s178, %s192
      %p194 = scmp.eq.s32.totalorder %s21, 0
      %p195 = por %p193, %p194
      %s197 = sadd.s32 %s196, 1
      %p200 = scmp.eq.s32.totalorder %s15, 1
      %p201 = scmp.ne.s32.totalorder %s196, %s198
      %p202 = scmp.eq.s32.totalorder %s15, 0
      %p203 = por %p201, %p202
      %p204 = scmp.ne.s32.totalorder %s196, %s198
      %p205 = scmp.eq.s32.totalorder %s20, 1
      %p206 = por %p204, %p205
      %p207 = scmp.ne.s32.totalorder %s198, %s199
      %p208 = scmp.eq.s32.totalorder %s20, 0
      %p209 = por %p207, %p208
      %p210 = scmp.ne.s32.totalorder %s198, %s199
      %p211 = scmp.eq.s32.totalorder %s21, 1
      %p212 = por %p210, %p211
      %p214 = scmp.ne.s32.totalorder %s199, %s213
      %p215 = scmp.eq.s32.totalorder %s21, 0
      %p216 = por %p214, %p215
      %s217 = ssub.s32 %s15, %s22
      %p218 = scmp.eq.s32.totalorder %s217, 0
      %s220 = sadd.s32 %s219, 1
      %s221 = scalar_select %p218, %s219, %s220
      %p224 = pneg %p218
      %p225 = scmp.eq.s32.totalorder %s15, 1
      %p226 = por %p224, %p225
      %p227 = scmp.ne.s32.totalorder %s219, %s222
      %p228 = scmp.eq.s32.totalorder %s15, 0
      %p229 = por %p227, %p228
      %p230 = scmp.ne.s32.totalorder %s219, %s222
      %p231 = scmp.eq.s32.totalorder %s20, 1
      %p232 = por %p230, %p231
      %p233 = scmp.ne.s32.totalorder %s222, %s223
      %p234 = scmp.eq.s32.totalorder %s20, 0
      %p235 = por %p233, %p234
      %p236 = scmp.ne.s32.totalorder %s222, %s223
      %p237 = scmp.eq.s32.totalorder %s21, 1
      %p238 = por %p236, %p237
      %p240 = scmp.ne.s32.totalorder %s223, %s239
      %p241 = scmp.eq.s32.totalorder %s21, 0
      %p242 = por %p240, %p241
      %p243 = scmp.le.s32.totalorder 1, %s15
      %p244 = scmp.lt.s32.totalorder %s15, 3
      %p245 = pnand %p243, %p244
      %p246 = pneg %p245
      // Predicated region
      $region9: #{tpu_custom_call.1} parent=5 // pred_check
        _
      $region10: #{tpu_custom_call.1} parent=5 // pred_check_branch
        %248 = sbr.rel (%p245) target = $region12
      $region11: #{tpu_custom_call.1} parent=5 // pred_region
        %s249 = ssub.s32 %s15, 1
        // Predicated region
        $region13: #{tpu_custom_call.1} parent=11 // pred_check
          %p250 = pneg %p62
        $region14: #{tpu_custom_call.1} parent=11 // pred_check_branch
          %252 = sbr.rel (%p250) target = $region16
        $region15: #{tpu_custom_call.1} parent=11 // pred_region
          _
        $region16: #{tpu_custom_call.1} parent=11 // pred_fallthru
          _
        // Predicated region
        $region17: #{tpu_custom_call.1} parent=11 // pred_check
          %p253 = pneg %p83
        $region18: #{tpu_custom_call.1} parent=11 // pred_check_branch
          %255 = sbr.rel (%p253) target = $region20
        $region19: #{tpu_custom_call.1} parent=11 // pred_region
          _
        $region20: #{tpu_custom_call.1} parent=11 // pred_fallthru
          _
        // Predicated region
        $region21: #{tpu_custom_call.1} parent=11 // pred_check
          %p256 = pneg %p104
        $region22: #{tpu_custom_call.1} parent=11 // pred_check_branch
          %258 = sbr.rel (%p256) target = $region24
        $region23: #{tpu_custom_call.1} parent=11 // pred_region
          _
        $region24: #{tpu_custom_call.1} parent=11 // pred_fallthru
          _
        // Predicated region
        $region25: #{tpu_custom_call.1} parent=11 // pred_check
          %p259 = pneg %p125
        $region26: #{tpu_custom_call.1} parent=11 // pred_check_branch
          %261 = sbr.rel (%p259) target = $region28
        $region27: #{tpu_custom_call.1} parent=11 // pred_region
          _
        $region28: #{tpu_custom_call.1} parent=11 // pred_fallthru
          _
        // Predicated region
        $region29: #{tpu_custom_call.1} parent=11 // pred_check
          %p262 = pneg %p146
        $region30: #{tpu_custom_call.1} parent=11 // pred_check_branch
          %264 = sbr.rel (%p262) target = $region32
        $region31: #{tpu_custom_call.1} parent=11 // pred_region
          _
        $region32: #{tpu_custom_call.1} parent=11 // pred_fallthru
          _
        // Predicated region
        $region33: #{tpu_custom_call.1} parent=11 // pred_check
          %p265 = pneg %p167
        $region34: #{tpu_custom_call.1} parent=11 // pred_check_branch
          %267 = sbr.rel (%p265) target = $region36
        $region35: #{tpu_custom_call.1} parent=11 // pred_region
          _
        $region36: #{tpu_custom_call.1} parent=11 // pred_fallthru
          _
        // Predicated region
        $region37: #{tpu_custom_call.1} parent=11 // pred_check
          %p268 = pneg %p188
        $region38: #{tpu_custom_call.1} parent=11 // pred_check_branch
          %270 = sbr.rel (%p268) target = $region40
        $region39: #{tpu_custom_call.1} parent=11 // pred_region
          _
        $region40: #{tpu_custom_call.1} parent=11 // pred_fallthru
          _
        // Predicated region
        $region41: #{tpu_custom_call.1} parent=11 // pred_check
          %p271 = pneg %p209
        $region42: #{tpu_custom_call.1} parent=11 // pred_check_branch
          %273 = sbr.rel (%p271) target = $region44
        $region43: #{tpu_custom_call.1} parent=11 // pred_region
          _
        $region44: #{tpu_custom_call.1} parent=11 // pred_fallthru
          _
      $region12: #{tpu_custom_call.1} parent=5 // pred_fallthru
        _
      %p274 = scmp.lt.s32.totalorder %s15, 2
      // Predicated region
      $region45: #{tpu_custom_call.1} parent=5 // pred_check
        %p275 = pneg %p274
      $region46: #{tpu_custom_call.1} parent=5 // pred_check_branch
        %277 = sbr.rel (%p275) target = $region48
      $region47: #{tpu_custom_call.1} parent=5 // pred_region
        // Predicated region
        $region49: #{tpu_custom_call.1} parent=47 // pred_check
          %p278 = pneg %p35
        $region50: #{tpu_custom_call.1} parent=47 // pred_check_branch
          %280 = sbr.rel (%p278) target = $region52
        $region51: #{tpu_custom_call.1} parent=47 // pred_region
          %s281 = smul.u32 32, %s15
          %s282 = ssub.s32 38, %s281
          %p283 = scmp.lt.s32.totalorder %s282, 32
          %s284 = scalar_select %p283, %s282, 32
          %s285 = smul.u32 128, %s284
          %p286 = scmp.lt.s32.totalorder %s281, 37
          %s287 = scalar_select %p286, %s281, 37
          %s288 = smul.addr %s287, 8
          %s289 = scalar_lea.vmem %s0, %s288
          %s290 = smul.u32 32, %s15
          %s291 = ssub.s32 38, %s290
          %p292 = scmp.lt.s32.totalorder %s291, 32
          %s293 = scalar_select %p292, %s291, 32
          %s294 = smul.u32 128, %s293
        $region52: #{tpu_custom_call.1} parent=47 // pred_fallthru
          _
      $region48: #{tpu_custom_call.1} parent=5 // pred_fallthru
        _
      %p295 = scmp.le.s32.totalorder 1, %s15
      %p296 = scmp.lt.s32.totalorder %s15, 3
      %p297 = pnand %p295, %p296
      %p298 = pneg %p297
      // Predicated region
      $region53: #{tpu_custom_call.1} parent=5 // pred_check
        _
      $region54: #{tpu_custom_call.1} parent=5 // pred_check_branch
        %300 = sbr.rel (%p297) target = $region56
      $region55: #{tpu_custom_call.1} parent=5 // pred_region
        %s301 = ssub.s32 %s15, 1
        %s302 = smul.u32 32, %s20
        %s303 = ssub.s32 38, %s302
        %p304 = scmp.lt.s32.totalorder %s303, 32
        %s305 = scalar_select %p304, %s303, 32
        %s306 = smul.u32 128, %s305
        %p307 = scmp.lt.s32.totalorder %s302, 37
        %s308 = scalar_select %p307, %s302, 37
        %s309 = smul.addr %s308, 8
        %s310 = scalar_lea.vmem %s0, %s309
        %p311 = pneg %p41
        %p312 = pneg %p38
        %p313 = pneg %p62
        %p314 = pneg %p59
        %p315 = pneg %p83
        %p316 = pneg %p80
        %p317 = pneg %p104
        %p318 = pneg %p101
        %p319 = pneg %p125
        %p320 = pneg %p122
        %p321 = pneg %p146
        %p322 = pneg %p143
        %p323 = pneg %p167
        %p324 = pneg %p164
        %p325 = pneg %p188
        %p326 = pneg %p185
        %p327 = pneg %p209
        %p328 = pneg %p206
        %p329 = pneg %p235
        %p330 = pneg %p232
        %s331 = sand.u32 %s222, 1
        %s332 = sand.u32 %s222, 1
        %s333 = smul.addr %s332, 256
        %s334 = scalar_lea.vmem [#allocation2], %s333
        %s335 = smul.u32 32, %s20
        %s336 = ssub.s32 38, %s335
        %p337 = scmp.lt.s32.totalorder %s336, 32
        %s338 = scalar_select %p337, %s336, 32
        %s339 = smul.u32 128, %s338
        %p340 = scmp.lt.s32.totalorder %s335, 37
        %s341 = scalar_select %p340, %s335, 37
        %s342 = smul.addr %s341, 8
        %s343 = scalar_lea.vmem %s0, %s342
        %s344 = smul.u32 32, %s20
        %s345 = ssub.s32 38, %s344
        %p346 = scmp.lt.s32.totalorder %s345, 32
        %s347 = scalar_select %p346, %s345, 32
        %s348 = smul.u32 128, %s347
        %s349 = smul.u32 32, %s20
        %s350 = ssub.s32 38, %s349
        %p351 = scmp.lt.s32.totalorder %s350, 32
        %s352 = scalar_select %p351, %s350, 32
        %s353 = smul.u32 128, %s352
        %v354 = vld [vmem:[%s343] sm:$0xff]
        %v355 = vld [vmem:[%s343 + $0x8] sm:$0xff]
        %v356 = vld [vmem:[%s343 + $0x10] sm:$0xff]
        %v357 = vld [vmem:[%s343 + $0x18] sm:$0xff]
        %v358 = vld [vmem:[%s343 + $0x20] sm:$0xff]
        %v359 = vld [vmem:[%s343 + $0x28] sm:$0xff]
        %v360 = vld [vmem:[%s343 + $0x30] sm:$0xff]
        %v361 = vld [vmem:[%s343 + $0x38] sm:$0xff]
        %v362 = vld [vmem:[%s343 + $0x40] sm:$0xff]
        %v363 = vld [vmem:[%s343 + $0x48] sm:$0xff]
        %v364 = vld [vmem:[%s343 + $0x50] sm:$0xff]
        %v365 = vld [vmem:[%s343 + $0x58] sm:$0xff]
        %v366 = vld [vmem:[%s343 + $0x60] sm:$0xff]
        %v367 = vld [vmem:[%s343 + $0x68] sm:$0xff]
        %v368 = vld [vmem:[%s343 + $0x70] sm:$0xff]
        %v369 = vld [vmem:[%s343 + $0x78] sm:$0xff]
        %v370 = vld [vmem:[%s343 + $0x80] sm:$0xff]
        %v371 = vld [vmem:[%s343 + $0x88] sm:$0xff]
        %v372 = vld [vmem:[%s343 + $0x90] sm:$0xff]
        %v373 = vld [vmem:[%s343 + $0x98] sm:$0xff]
        %v374 = vld [vmem:[%s343 + $0xa0] sm:$0xff]
        %v375 = vld [vmem:[%s343 + $0xa8] sm:$0xff]
        %v376 = vld [vmem:[%s343 + $0xb0] sm:$0xff]
        %v377 = vld [vmem:[%s343 + $0xb8] sm:$0xff]
        %v378 = vld [vmem:[%s343 + $0xc0] sm:$0xff]
        %v379 = vld [vmem:[%s343 + $0xc8] sm:$0xff]
        %v380 = vld [vmem:[%s343 + $0xd0] sm:$0xff]
        %v381 = vld [vmem:[%s343 + $0xd8] sm:$0xff]
        %v382 = vld [vmem:[%s343 + $0xe0] sm:$0xff]
        %v383 = vld [vmem:[%s343 + $0xe8] sm:$0xff]
        %v384 = vld [vmem:[%s343 + $0xf0] sm:$0xff]
        %v385 = vld [vmem:[%s343 + $0xf8] sm:$0xff]
        %v386 = vld [vmem:[%s1] sm:$0x3f]
        %v387 = vld [vmem:[%s2] sm:$0x1]
        %v389 = vlaneseq
        %v390 = vshrl.u32 %v389, 7
        %v391 = vsub.s32 0, %v390
        %v392 = vrot.slane %v387, %v391
        %vm394 = vcmask 48128
        %v396 = vsel %vm394, %v354, 0
        %v399 = vsel %vm394, %v355, 0
        %v402 = vsel %vm394, %v356, 0
        %v405 = vsel %vm394, %v357, 0
        %v408 = vsel %vm394, %v358, 0
        %v411 = vsel %vm394, %v359, 0
        %v414 = vsel %vm394, %v360, 0
        %v417 = vsel %vm394, %v361, 0
        %v420 = vsel %vm394, %v362, 0
        %v423 = vsel %vm394, %v363, 0
        %v426 = vsel %vm394, %v364, 0
        %v429 = vsel %vm394, %v365, 0
        %v432 = vsel %vm394, %v366, 0
        %v435 = vsel %vm394, %v367, 0
        %v438 = vsel %vm394, %v368, 0
        %v441 = vsel %vm394, %v369, 0
        %v444 = vsel %vm394, %v370, 0
        %v447 = vsel %vm394, %v371, 0
        %v450 = vsel %vm394, %v372, 0
        %v453 = vsel %vm394, %v373, 0
        %v456 = vsel %vm394, %v374, 0
        %v459 = vsel %vm394, %v375, 0
        %v462 = vsel %vm394, %v376, 0
        %v465 = vsel %vm394, %v377, 0
        %v468 = vsel %vm394, %v378, 0
        %v471 = vsel %vm394, %v379, 0
        %v474 = vsel %vm394, %v380, 0
        %v477 = vsel %vm394, %v381, 0
        %v480 = vsel %vm394, %v382, 0
        %v483 = vsel %vm394, %v383, 0
        %v486 = vsel %vm394, %v384, 0
        %v489 = vsel %vm394, %v385, 0
        %vm491 = vcmask 1045504
        %v493 = vsel %vm491, %v386, 0
        %495 = vmatprep.subr.mxu0 0.0
        %496 = vmatpush1.msra.mxu0 %v493
        %497 = vmatprep.subr.mxu0 0.0
        %498 = vmatpush1.msra.mxu0 0.0
        %499 = vmatprep.subr.mxu0 0.0
        %500 = vmatpush1.msra.mxu0 0.0
        %501 = vmatprep.subr.mxu0 0.0
        %502 = vmatpush1.msra.mxu0 0.0
        %503 = vmatprep.subr.mxu0 0.0
        %504 = vmatpush1.msra.mxu0 0.0
        %505 = vmatprep.subr.mxu0 0.0
        %506 = vmatpush1.msra.mxu0 0.0
        %507 = vmatprep.subr.mxu0 0.0
        %508 = vmatpush1.msra.mxu0 0.0
        %509 = vmatprep.subr.mxu0 0.0
        %510 = vmatpush1.msra.mxu0 0.0
        %511 = vmatprep.subr.mxu0 0.0
        %512 = vmatpush1.msra.mxu0 0.0
        %513 = vmatprep.subr.mxu0 0.0
        %514 = vmatpush1.msra.mxu0 0.0
        %515 = vmatprep.subr.mxu0 0.0
        %516 = vmatpush1.msra.mxu0 0.0
        %517 = vmatprep.subr.mxu0 0.0
        %518 = vmatpush1.msra.mxu0 0.0
        %519 = vmatprep.subr.mxu0 0.0
        %520 = vmatpush1.msra.mxu0 0.0
        %521 = vmatprep.subr.mxu0 0.0
        %522 = vmatpush1.msra.mxu0 0.0
        %523 = vmatprep.subr.mxu0 0.0
        %524 = vmatpush1.msra.mxu0 0.0
        %525 = vmatprep.subr.mxu0 0.0
        %526 = vmatpush1.msra.mxu0 0.0
        %527 = vmatprep.subr.mxu0 0.0
        %528 = vmatpush1.msra.mxu0 0.0
        %529 = vmatprep.subr.mxu0 0.0
        %530 = vmatpush1.msra.mxu0 0.0
        %531 = vmatprep.subr.mxu0 0.0
        %532 = vmatpush1.msra.mxu0 0.0
        %533 = vmatprep.subr.mxu0 0.0
        %534 = vmatpush1.msra.mxu0 0.0
        %535 = vmatprep.subr.mxu0 0.0
        %536 = vmatpush1.msra.mxu0 0.0
        %537 = vmatprep.subr.mxu0 0.0
        %538 = vmatpush1.msra.mxu0 0.0
        %539 = vmatprep.subr.mxu0 0.0
        %540 = vmatpush1.msra.mxu0 0.0
        %541 = vmatprep.subr.mxu0 0.0
        %542 = vmatpush1.msra.mxu0 0.0
        %543 = vmatprep.subr.mxu0 0.0
        %544 = vmatpush1.msra.mxu0 0.0
        %545 = vmatprep.subr.mxu0 0.0
        %546 = vmatpush1.msra.mxu0 0.0
        %547 = vmatprep.subr.mxu0 0.0
        %548 = vmatpush1.msra.mxu0 0.0
        %549 = vmatprep.subr.mxu0 0.0
        %550 = vmatpush1.msra.mxu0 0.0
        %551 = vmatprep.subr.mxu0 0.0
        %552 = vmatpush1.msra.mxu0 0.0
        %553 = vmatprep.subr.mxu0 0.0
        %554 = vmatpush1.msra.mxu0 0.0
        %555 = vmatprep.subr.mxu0 0.0
        %556 = vmatpush1.msra.mxu0 0.0
        %557 = vmatprep.subr.mxu0 0.0
        %558 = vmatpush1.msra.mxu0 0.0
        %559 = vmatprep.mubr.f32.mxu0 0.0
        %560 = vmatmul.mubr.f32.gmra.mrb[0].mxu0 %v396
        %v561 = vpop.f32.mrb[0].mxu0
        %v562 = vadd.f32 %v392, %v561
        %v563 = vpop.f32.mrb[0].mxu0
        %564 = vmatprep.mubr.f32.mxu0 0.0
        %565 = vmatmul.mubr.f32.gmra.mrb[0].mxu0 %v399
        %v566 = vpop.f32.mrb[0].mxu0
        %v567 = vadd.f32 %v392, %v566
        %v568 = vpop.f32.mrb[0].mxu0
        %569 = vmatprep.mubr.f32.mxu0 0.0
        %570 = vmatmul.mubr.f32.gmra.mrb[0].mxu0 %v402
        %v571 = vpop.f32.mrb[0].mxu0
        %v572 = vadd.f32 %v392, %v571
        %v573 = vpop.f32.mrb[0].mxu0
        %574 = vmatprep.mubr.f32.mxu0 0.0
        %575 = vmatmul.mubr.f32.gmra.mrb[0].mxu0 %v405
        %v576 = vpop.f32.mrb[0].mxu0
        %v577 = vadd.f32 %v392, %v576
        %v578 = vpop.f32.mrb[0].mxu0
        %579 = vmatprep.mubr.f32.mxu0 0.0
        %580 = vmatmul.mubr.f32.gmra.mrb[0].mxu0 %v408
        %v581 = vpop.f32.mrb[0].mxu0
        %v582 = vadd.f32 %v392, %v581
        %v583 = vpop.f32.mrb[0].mxu0
        %584 = vmatprep.mubr.f32.mxu0 0.0
        %585 = vmatmul.mubr.f32.gmra.mrb[0].mxu0 %v411
        %v586 = vpop.f32.mrb[0].mxu0
        %v587 = vadd.f32 %v392, %v586
        %v588 = vpop.f32.mrb[0].mxu0
        %589 = vmatprep.mubr.f32.mxu0 0.0
        %590 = vmatmul.mubr.f32.gmra.mrb[0].mxu0 %v414
        %v591 = vpop.f32.mrb[0].mxu0
        %v592 = vadd.f32 %v392, %v591
        %v593 = vpop.f32.mrb[0].mxu0
        %594 = vmatprep.mubr.f32.mxu0 0.0
        %595 = vmatmul.mubr.f32.gmra.mrb[0].mxu0 %v417
        %v596 = vpop.f32.mrb[0].mxu0
        %v597 = vadd.f32 %v392, %v596
        %v598 = vpop.f32.mrb[0].mxu0
        %599 = vmatprep.mubr.f32.mxu0 0.0
        %600 = vmatmul.mubr.f32.gmra.mrb[0].mxu0 %v420
        %v601 = vpop.f32.mrb[0].mxu0
        %v602 = vadd.f32 %v392, %v601
        %v603 = vpop.f32.mrb[0].mxu0
        %604 = vmatprep.mubr.f32.mxu0 0.0
        %605 = vmatmul.mubr.f32.gmra.mrb[0].mxu0 %v423
        %v606 = vpop.f32.mrb[0].mxu0
        %v607 = vadd.f32 %v392, %v606
        %v608 = vpop.f32.mrb[0].mxu0
        %609 = vmatprep.mubr.f32.mxu0 0.0
        %610 = vmatmul.mubr.f32.gmra.mrb[0].mxu0 %v426
        %v611 = vpop.f32.mrb[0].mxu0
        %v612 = vadd.f32 %v392, %v611
        %v613 = vpop.f32.mrb[0].mxu0
        %614 = vmatprep.mubr.f32.mxu0 0.0
        %615 = vmatmul.mubr.f32.gmra.mrb[0].mxu0 %v429
        %v616 = vpop.f32.mrb[0].mxu0
        %v617 = vadd.f32 %v392, %v616
        %v618 = vpop.f32.mrb[0].mxu0
        %619 = vmatprep.mubr.f32.mxu0 0.0
        %620 = vmatmul.mubr.f32.gmra.mrb[0].mxu0 %v432
        %v621 = vpop.f32.mrb[0].mxu0
        %v622 = vadd.f32 %v392, %v621
        %v623 = vpop.f32.mrb[0].mxu0
        %624 = vmatprep.mubr.f32.mxu0 0.0
        %625 = vmatmul.mubr.f32.gmra.mrb[0].mxu0 %v435
        %v626 = vpop.f32.mrb[0].mxu0
        %v627 = vadd.f32 %v392, %v626
        %v628 = vpop.f32.mrb[0].mxu0
        %629 = vmatprep.mubr.f32.mxu0 0.0
        %630 = vmatmul.mubr.f32.gmra.mrb[0].mxu0 %v438
        %v631 = vpop.f32.mrb[0].mxu0
        %v632 = vadd.f32 %v392, %v631
        %v633 = vpop.f32.mrb[0].mxu0
        %634 = vmatprep.mubr.f32.mxu0 0.0
        %635 = vmatmul.mubr.f32.gmra.mrb[0].mxu0 %v441
        %v636 = vpop.f32.mrb[0].mxu0
        %v637 = vadd.f32 %v392, %v636
        %v638 = vpop.f32.mrb[0].mxu0
        %639 = vmatprep.mubr.f32.mxu0 0.0
        %640 = vmatmul.mubr.f32.gmra.mrb[0].mxu0 %v444
        %v641 = vpop.f32.mrb[0].mxu0
        %v642 = vadd.f32 %v392, %v641
        %v643 = vpop.f32.mrb[0].mxu0
        %644 = vmatprep.mubr.f32.mxu0 0.0
        %645 = vmatmul.mubr.f32.gmra.mrb[0].mxu0 %v447
        %v646 = vpop.f32.mrb[0].mxu0
        %v647 = vadd.f32 %v392, %v646
        %v648 = vpop.f32.mrb[0].mxu0
        %649 = vmatprep.mubr.f32.mxu0 0.0
        %650 = vmatmul.mubr.f32.gmra.mrb[0].mxu0 %v450
        %v651 = vpop.f32.mrb[0].mxu0
        %v652 = vadd.f32 %v392, %v651
        %v653 = vpop.f32.mrb[0].mxu0
        %654 = vmatprep.mubr.f32.mxu0 0.0
        %655 = vmatmul.mubr.f32.gmra.mrb[0].mxu0 %v453
        %v656 = vpop.f32.mrb[0].mxu0
        %v657 = vadd.f32 %v392, %v656
        %v658 = vpop.f32.mrb[0].mxu0
        %659 = vmatprep.mubr.f32.mxu0 0.0
        %660 = vmatmul.mubr.f32.gmra.mrb[0].mxu0 %v456
        %v661 = vpop.f32.mrb[0].mxu0
        %v662 = vadd.f32 %v392, %v661
        %v663 = vpop.f32.mrb[0].mxu0
        %664 = vmatprep.mubr.f32.mxu0 0.0
        %665 = vmatmul.mubr.f32.gmra.mrb[0].mxu0 %v459
        %v666 = vpop.f32.mrb[0].mxu0
        %v667 = vadd.f32 %v392, %v666
        %v668 = vpop.f32.mrb[0].mxu0
        %669 = vmatprep.mubr.f32.mxu0 0.0
        %670 = vmatmul.mubr.f32.gmra.mrb[0].mxu0 %v462
        %v671 = vpop.f32.mrb[0].mxu0
        %v672 = vadd.f32 %v392, %v671
        %v673 = vpop.f32.mrb[0].mxu0
        %674 = vmatprep.mubr.f32.mxu0 0.0
        %675 = vmatmul.mubr.f32.gmra.mrb[0].mxu0 %v465
        %v676 = vpop.f32.mrb[0].mxu0
        %v677 = vadd.f32 %v392, %v676
        %v678 = vpop.f32.mrb[0].mxu0
        %679 = vmatprep.mubr.f32.mxu0 0.0
        %680 = vmatmul.mubr.f32.gmra.mrb[0].mxu0 %v468
        %v681 = vpop.f32.mrb[0].mxu0
        %v682 = vadd.f32 %v392, %v681
        %v683 = vpop.f32.mrb[0].mxu0
        %684 = vmatprep.mubr.f32.mxu0 0.0
        %685 = vmatmul.mubr.f32.gmra.mrb[0].mxu0 %v471
        %v686 = vpop.f32.mrb[0].mxu0
        %v687 = vadd.f32 %v392, %v686
        %v688 = vpop.f32.mrb[0].mxu0
        %689 = vmatprep.mubr.f32.mxu0 0.0
        %690 = vmatmul.mubr.f32.gmra.mrb[0].mxu0 %v474
        %v691 = vpop.f32.mrb[0].mxu0
        %v692 = vadd.f32 %v392, %v691
        %v693 = vpop.f32.mrb[0].mxu0
        %694 = vmatprep.mubr.f32.mxu0 0.0
        %695 = vmatmul.mubr.f32.gmra.mrb[0].mxu0 %v477
        %v696 = vpop.f32.mrb[0].mxu0
        %v697 = vadd.f32 %v392, %v696
        %v698 = vpop.f32.mrb[0].mxu0
        %699 = vmatprep.mubr.f32.mxu0 0.0
        %700 = vmatmul.mubr.f32.gmra.mrb[0].mxu0 %v480
        %v701 = vpop.f32.mrb[0].mxu0
        %v702 = vadd.f32 %v392, %v701
        %v703 = vpop.f32.mrb[0].mxu0
        %704 = vmatprep.mubr.f32.mxu0 0.0
        %705 = vmatmul.mubr.f32.gmra.mrb[0].mxu0 %v483
        %v706 = vpop.f32.mrb[0].mxu0
        %v707 = vadd.f32 %v392, %v706
        %v708 = vpop.f32.mrb[0].mxu0
        %709 = vmatprep.mubr.f32.mxu0 0.0
        %710 = vmatmul.mubr.f32.gmra.mrb[0].mxu0 %v486
        %v711 = vpop.f32.mrb[0].mxu0
        %v712 = vadd.f32 %v392, %v711
        %v713 = vpop.f32.mrb[0].mxu0
        %714 = vmatprep.mubr.f32.mxu0 0.0
        %715 = vmatmul.mubr.f32.gmra.mrb[0].mxu0 %v489
        %v716 = vpop.f32.mrb[0].mxu0
        %v717 = vadd.f32 %v392, %v716
        %v718 = vpop.f32.mrb[0].mxu0
        %719 = vdwg.mxu0
        %v720 = vmax.f32 %v562, 0.0
        %v721 = vmax.f32 %v567, 0.0
        %v722 = vmax.f32 %v572, 0.0
        %v723 = vmax.f32 %v577, 0.0
        %v724 = vmax.f32 %v582, 0.0
        %v725 = vmax.f32 %v587, 0.0
        %v726 = vmax.f32 %v592, 0.0
        %v727 = vmax.f32 %v597, 0.0
        %v728 = vmax.f32 %v602, 0.0
        %v729 = vmax.f32 %v607, 0.0
        %v730 = vmax.f32 %v612, 0.0
        %v731 = vmax.f32 %v617, 0.0
        %v732 = vmax.f32 %v622, 0.0
        %v733 = vmax.f32 %v627, 0.0
        %v734 = vmax.f32 %v632, 0.0
        %v735 = vmax.f32 %v637, 0.0
        %v736 = vmax.f32 %v642, 0.0
        %v737 = vmax.f32 %v647, 0.0
        %v738 = vmax.f32 %v652, 0.0
        %v739 = vmax.f32 %v657, 0.0
        %v740 = vmax.f32 %v662, 0.0
        %v741 = vmax.f32 %v667, 0.0
        %v742 = vmax.f32 %v672, 0.0
        %v743 = vmax.f32 %v677, 0.0
        %v744 = vmax.f32 %v682, 0.0
        %v745 = vmax.f32 %v687, 0.0
        %v746 = vmax.f32 %v692, 0.0
        %v747 = vmax.f32 %v697, 0.0
        %v748 = vmax.f32 %v702, 0.0
        %v749 = vmax.f32 %v707, 0.0
        %v750 = vmax.f32 %v712, 0.0
        %v751 = vmax.f32 %v717, 0.0
        %v752 = vld [vmem:[%s3] sm:$0xff]
        %v753 = vld [vmem:[%s3 + $0x8] sm:$0xff]
        %v754 = vld [vmem:[%s3 + $0x10] sm:$0xff]
        %v755 = vld [vmem:[%s3 + $0x18] sm:$0xff]
        %v756 = vld [vmem:[%s3 + $0x20] sm:$0xff]
        %v757 = vld [vmem:[%s3 + $0x28] sm:$0xff]
        %v758 = vld [vmem:[%s3 + $0x30] sm:$0xff]
        %v759 = vld [vmem:[%s3 + $0x38] sm:$0xff]
        %v760 = vld [vmem:[%s4] sm:$0x1]
        %v762 = vlaneseq
        %v763 = vshrl.u32 %v762, 7
        %v764 = vsub.s32 0, %v763
        %v765 = vrot.slane %v760, %v764
        %vm767 = vcmask 523264
        %v769 = vsel %vm767, %v720, 0
        %v772 = vsel %vm767, %v721, 0
        %v775 = vsel %vm767, %v722, 0
        %v778 = vsel %vm767, %v723, 0
        %v781 = vsel %vm767, %v724, 0
        %v784 = vsel %vm767, %v725, 0
        %v787 = vsel %vm767, %v726, 0
        %v790 = vsel %vm767, %v727, 0
        %v793 = vsel %vm767, %v728, 0
        %v796 = vsel %vm767, %v729, 0
        %v799 = vsel %vm767, %v730, 0
        %v802 = vsel %vm767, %v731, 0
        %v805 = vsel %vm767, %v732, 0
        %v808 = vsel %vm767, %v733, 0
        %v811 = vsel %vm767, %v734, 0
        %v814 = vsel %vm767, %v735, 0
        %v817 = vsel %vm767, %v736, 0
        %v820 = vsel %vm767, %v737, 0
        %v823 = vsel %vm767, %v738, 0
        %v826 = vsel %vm767, %v739, 0
        %v829 = vsel %vm767, %v740, 0
        %v832 = vsel %vm767, %v741, 0
        %v835 = vsel %vm767, %v742, 0
        %v838 = vsel %vm767, %v743, 0
        %v841 = vsel %vm767, %v744, 0
        %v844 = vsel %vm767, %v745, 0
        %v847 = vsel %vm767, %v746, 0
        %v850 = vsel %vm767, %v747, 0
        %v853 = vsel %vm767, %v748, 0
        %v856 = vsel %vm767, %v749, 0
        %v859 = vsel %vm767, %v750, 0
        %v862 = vsel %vm767, %v751, 0
        %864 = vmatprep.subr.mxu0 0.0
        %865 = vmatpush1.msra.mxu0 %v752
        %866 = vmatprep.subr.mxu0 0.0
        %867 = vmatpush1.msra.mxu0 %v753
        %868 = vmatprep.subr.mxu0 0.0
        %869 = vmatpush1.msra.mxu0 %v754
        %870 = vmatprep.subr.mxu0 0.0
        %871 = vmatpush1.msra.mxu0 %v755
        %872 = vmatprep.subr.mxu0 0.0
        %873 = vmatpush1.msra.mxu0 %v756
        %874 = vmatprep.subr.mxu0 0.0
        %875 = vmatpush1.msra.mxu0 %v757
        %876 = vmatprep.subr.mxu0 0.0
        %877 = vmatpush1.msra.mxu0 %v758
        %878 = vmatprep.subr.mxu0 0.0
        %879 = vmatpush1.msra.mxu0 %v759
        %880 = vmatprep.subr.mxu0 0.0
        %881 = vmatpush1.msra.mxu0 0.0
        %882 = vmatprep.subr.mxu0 0.0
        %883 = vmatpush1.msra.mxu0 0.0
        %884 = vmatprep.subr.mxu0 0.0
        %885 = vmatpush1.msra.mxu0 0.0
        %886 = vmatprep.subr.mxu0 0.0
        %887 = vmatpush1.msra.mxu0 0.0
        %888 = vmatprep.subr.mxu0 0.0
        %889 = vmatpush1.msra.mxu0 0.0
        %890 = vmatprep.subr.mxu0 0.0
        %891 = vmatpush1.msra.mxu0 0.0
        %892 = vmatprep.subr.mxu0 0.0
        %893 = vmatpush1.msra.mxu0 0.0
        %894 = vmatprep.subr.mxu0 0.0
        %895 = vmatpush1.msra.mxu0 0.0
        %896 = vmatprep.subr.mxu0 0.0
        %897 = vmatpush1.msra.mxu0 0.0
        %898 = vmatprep.subr.mxu0 0.0
        %899 = vmatpush1.msra.mxu0 0.0
        %900 = vmatprep.subr.mxu0 0.0
        %901 = vmatpush1.msra.mxu0 0.0
        %902 = vmatprep.subr.mxu0 0.0
        %903 = vmatpush1.msra.mxu0 0.0
        %904 = vmatprep.subr.mxu0 0.0
        %905 = vmatpush1.msra.mxu0 0.0
        %906 = vmatprep.subr.mxu0 0.0
        %907 = vmatpush1.msra.mxu0 0.0
        %908 = vmatprep.subr.mxu0 0.0
        %909 = vmatpush1.msra.mxu0 0.0
        %910 = vmatprep.subr.mxu0 0.0
        %911 = vmatpush1.msra.mxu0 0.0
        %912 = vmatprep.subr.mxu0 0.0
        %913 = vmatpush1.msra.mxu0 0.0
        %914 = vmatprep.subr.mxu0 0.0
        %915 = vmatpush1.msra.mxu0 0.0
        %916 = vmatprep.subr.mxu0 0.0
        %917 = vmatpush1.msra.mxu0 0.0
        %918 = vmatprep.subr.mxu0 0.0
        %919 = vmatpush1.msra.mxu0 0.0
        %920 = vmatprep.subr.mxu0 0.0
        %921 = vmatpush1.msra.mxu0 0.0
        %922 = vmatprep.subr.mxu0 0.0
        %923 = vmatpush1.msra.mxu0 0.0
        %924 = vmatprep.subr.mxu0 0.0
        %925 = vmatpush1.msra.mxu0 0.0
        %926 = vmatprep.subr.mxu0 0.0
        %927 = vmatpush1.msra.mxu0 0.0
        %928 = vmatprep.mubr.f32.mxu0 0.0
        %929 = vmatmul.mubr.f32.gmra.mrb[0].mxu0 %v769
        %v930 = vpop.f32.mrb[0].mxu0
        %v931 = vadd.f32 %v765, %v930
        %v932 = vpop.f32.mrb[0].mxu0
        %933 = vmatprep.mubr.f32.mxu0 0.0
        %934 = vmatmul.mubr.f32.gmra.mrb[0].mxu0 %v772
        %v935 = vpop.f32.mrb[0].mxu0
        %v936 = vadd.f32 %v765, %v935
        %v937 = vpop.f32.mrb[0].mxu0
        %938 = vmatprep.mubr.f32.mxu0 0.0
        %939 = vmatmul.mubr.f32.gmra.mrb[0].mxu0 %v775
        %v940 = vpop.f32.mrb[0].mxu0
        %v941 = vadd.f32 %v765, %v940
        %v942 = vpop.f32.mrb[0].mxu0
        %943 = vmatprep.mubr.f32.mxu0 0.0
        %944 = vmatmul.mubr.f32.gmra.mrb[0].mxu0 %v778
        %v945 = vpop.f32.mrb[0].mxu0
        %v946 = vadd.f32 %v765, %v945
        %v947 = vpop.f32.mrb[0].mxu0
        %948 = vmatprep.mubr.f32.mxu0 0.0
        %949 = vmatmul.mubr.f32.gmra.mrb[0].mxu0 %v781
        %v950 = vpop.f32.mrb[0].mxu0
        %v951 = vadd.f32 %v765, %v950
        %v952 = vpop.f32.mrb[0].mxu0
        %953 = vmatprep.mubr.f32.mxu0 0.0
        %954 = vmatmul.mubr.f32.gmra.mrb[0].mxu0 %v784
        %v955 = vpop.f32.mrb[0].mxu0
        %v956 = vadd.f32 %v765, %v955
        %v957 = vpop.f32.mrb[0].mxu0
        %958 = vmatprep.mubr.f32.mxu0 0.0
        %959 = vmatmul.mubr.f32.gmra.mrb[0].mxu0 %v787
        %v960 = vpop.f32.mrb[0].mxu0
        %v961 = vadd.f32 %v765, %v960
        %v962 = vpop.f32.mrb[0].mxu0
        %963 = vmatprep.mubr.f32.mxu0 0.0
        %964 = vmatmul.mubr.f32.gmra.mrb[0].mxu0 %v790
        %v965 = vpop.f32.mrb[0].mxu0
        %v966 = vadd.f32 %v765, %v965
        %v967 = vpop.f32.mrb[0].mxu0
        %968 = vmatprep.mubr.f32.mxu0 0.0
        %969 = vmatmul.mubr.f32.gmra.mrb[0].mxu0 %v793
        %v970 = vpop.f32.mrb[0].mxu0
        %v971 = vadd.f32 %v765, %v970
        %v972 = vpop.f32.mrb[0].mxu0
        %973 = vmatprep.mubr.f32.mxu0 0.0
        %974 = vmatmul.mubr.f32.gmra.mrb[0].mxu0 %v796
        %v975 = vpop.f32.mrb[0].mxu0
        %v976 = vadd.f32 %v765, %v975
        %v977 = vpop.f32.mrb[0].mxu0
        %978 = vmatprep.mubr.f32.mxu0 0.0
        %979 = vmatmul.mubr.f32.gmra.mrb[0].mxu0 %v799
        %v980 = vpop.f32.mrb[0].mxu0
        %v981 = vadd.f32 %v765, %v980
        %v982 = vpop.f32.mrb[0].mxu0
        %983 = vmatprep.mubr.f32.mxu0 0.0
        %984 = vmatmul.mubr.f32.gmra.mrb[0].mxu0 %v802
        %v985 = vpop.f32.mrb[0].mxu0
        %v986 = vadd.f32 %v765, %v985
        %v987 = vpop.f32.mrb[0].mxu0
        %988 = vmatprep.mubr.f32.mxu0 0.0
        %989 = vmatmul.mubr.f32.gmra.mrb[0].mxu0 %v805
        %v990 = vpop.f32.mrb[0].mxu0
        %v991 = vadd.f32 %v765, %v990
        %v992 = vpop.f32.mrb[0].mxu0
        %993 = vmatprep.mubr.f32.mxu0 0.0
        %994 = vmatmul.mubr.f32.gmra.mrb[0].mxu0 %v808
        %v995 = vpop.f32.mrb[0].mxu0
        %v996 = vadd.f32 %v765, %v995
        %v997 = vpop.f32.mrb[0].mxu0
        %998 = vmatprep.mubr.f32.mxu0 0.0
        %999 = vmatmul.mubr.f32.gmra.mrb[0].mxu0 %v811
        %v1000 = vpop.f32.mrb[0].mxu0
        %v1001 = vadd.f32 %v765, %v1000
        %v1002 = vpop.f32.mrb[0].mxu0
        %1003 = vmatprep.mubr.f32.mxu0 0.0
        %1004 = vmatmul.mubr.f32.gmra.mrb[0].mxu0 %v814
        %v1005 = vpop.f32.mrb[0].mxu0
        %v1006 = vadd.f32 %v765, %v1005
        %v1007 = vpop.f32.mrb[0].mxu0
        %1008 = vmatprep.mubr.f32.mxu0 0.0
        %1009 = vmatmul.mubr.f32.gmra.mrb[0].mxu0 %v817
        %v1010 = vpop.f32.mrb[0].mxu0
        %v1011 = vadd.f32 %v765, %v1010
        %v1012 = vpop.f32.mrb[0].mxu0
        %1013 = vmatprep.mubr.f32.mxu0 0.0
        %1014 = vmatmul.mubr.f32.gmra.mrb[0].mxu0 %v820
        %v1015 = vpop.f32.mrb[0].mxu0
        %v1016 = vadd.f32 %v765, %v1015
        %v1017 = vpop.f32.mrb[0].mxu0
        %1018 = vmatprep.mubr.f32.mxu0 0.0
        %1019 = vmatmul.mubr.f32.gmra.mrb[0].mxu0 %v823
        %v1020 = vpop.f32.mrb[0].mxu0
        %v1021 = vadd.f32 %v765, %v1020
        %v1022 = vpop.f32.mrb[0].mxu0
        %1023 = vmatprep.mubr.f32.mxu0 0.0
        %1024 = vmatmul.mubr.f32.gmra.mrb[0].mxu0 %v826
        %v1025 = vpop.f32.mrb[0].mxu0
        %v1026 = vadd.f32 %v765, %v1025
        %v1027 = vpop.f32.mrb[0].mxu0
        %1028 = vmatprep.mubr.f32.mxu0 0.0
        %1029 = vmatmul.mubr.f32.gmra.mrb[0].mxu0 %v829
        %v1030 = vpop.f32.mrb[0].mxu0
        %v1031 = vadd.f32 %v765, %v1030
        %v1032 = vpop.f32.mrb[0].mxu0
        %1033 = vmatprep.mubr.f32.mxu0 0.0
        %1034 = vmatmul.mubr.f32.gmra.mrb[0].mxu0 %v832
        %v1035 = vpop.f32.mrb[0].mxu0
        %v1036 = vadd.f32 %v765, %v1035
        %v1037 = vpop.f32.mrb[0].mxu0
        %1038 = vmatprep.mubr.f32.mxu0 0.0
        %1039 = vmatmul.mubr.f32.gmra.mrb[0].mxu0 %v835
        %v1040 = vpop.f32.mrb[0].mxu0
        %v1041 = vadd.f32 %v765, %v1040
        %v1042 = vpop.f32.mrb[0].mxu0
        %1043 = vmatprep.mubr.f32.mxu0 0.0
        %1044 = vmatmul.mubr.f32.gmra.mrb[0].mxu0 %v838
        %v1045 = vpop.f32.mrb[0].mxu0
        %v1046 = vadd.f32 %v765, %v1045
        %v1047 = vpop.f32.mrb[0].mxu0
        %1048 = vmatprep.mubr.f32.mxu0 0.0
        %1049 = vmatmul.mubr.f32.gmra.mrb[0].mxu0 %v841
        %v1050 = vpop.f32.mrb[0].mxu0
        %v1051 = vadd.f32 %v765, %v1050
        %v1052 = vpop.f32.mrb[0].mxu0
        %1053 = vmatprep.mubr.f32.mxu0 0.0
        %1054 = vmatmul.mubr.f32.gmra.mrb[0].mxu0 %v844
        %v1055 = vpop.f32.mrb[0].mxu0
        %v1056 = vadd.f32 %v765, %v1055
        %v1057 = vpop.f32.mrb[0].mxu0
        %1058 = vmatprep.mubr.f32.mxu0 0.0
        %1059 = vmatmul.mubr.f32.gmra.mrb[0].mxu0 %v847
        %v1060 = vpop.f32.mrb[0].mxu0
        %v1061 = vadd.f32 %v765, %v1060
        %v1062 = vpop.f32.mrb[0].mxu0
        %1063 = vmatprep.mubr.f32.mxu0 0.0
        %1064 = vmatmul.mubr.f32.gmra.mrb[0].mxu0 %v850
        %v1065 = vpop.f32.mrb[0].mxu0
        %v1066 = vadd.f32 %v765, %v1065
        %v1067 = vpop.f32.mrb[0].mxu0
        %1068 = vmatprep.mubr.f32.mxu0 0.0
        %1069 = vmatmul.mubr.f32.gmra.mrb[0].mxu0 %v853
        %v1070 = vpop.f32.mrb[0].mxu0
        %v1071 = vadd.f32 %v765, %v1070
        %v1072 = vpop.f32.mrb[0].mxu0
        %1073 = vmatprep.mubr.f32.mxu0 0.0
        %1074 = vmatmul.mubr.f32.gmra.mrb[0].mxu0 %v856
        %v1075 = vpop.f32.mrb[0].mxu0
        %v1076 = vadd.f32 %v765, %v1075
        %v1077 = vpop.f32.mrb[0].mxu0
        %1078 = vmatprep.mubr.f32.mxu0 0.0
        %1079 = vmatmul.mubr.f32.gmra.mrb[0].mxu0 %v859
        %v1080 = vpop.f32.mrb[0].mxu0
        %v1081 = vadd.f32 %v765, %v1080
        %v1082 = vpop.f32.mrb[0].mxu0
        %1083 = vmatprep.mubr.f32.mxu0 0.0
        %1084 = vmatmul.mubr.f32.gmra.mrb[0].mxu0 %v862
        %v1085 = vpop.f32.mrb[0].mxu0
        %v1086 = vadd.f32 %v765, %v1085
        %v1087 = vpop.f32.mrb[0].mxu0
        %1088 = vdwg.mxu0
        %v1089 = vmax.f32 %v931, 0.0
        %v1090 = vmax.f32 %v936, 0.0
        %v1091 = vmax.f32 %v941, 0.0
        %v1092 = vmax.f32 %v946, 0.0
        %v1093 = vmax.f32 %v951, 0.0
        %v1094 = vmax.f32 %v956, 0.0
        %v1095 = vmax.f32 %v961, 0.0
        %v1096 = vmax.f32 %v966, 0.0
        %v1097 = vmax.f32 %v971, 0.0
        %v1098 = vmax.f32 %v976, 0.0
        %v1099 = vmax.f32 %v981, 0.0
        %v1100 = vmax.f32 %v986, 0.0
        %v1101 = vmax.f32 %v991, 0.0
        %v1102 = vmax.f32 %v996, 0.0
        %v1103 = vmax.f32 %v1001, 0.0
        %v1104 = vmax.f32 %v1006, 0.0
        %v1105 = vmax.f32 %v1011, 0.0
        %v1106 = vmax.f32 %v1016, 0.0
        %v1107 = vmax.f32 %v1021, 0.0
        %v1108 = vmax.f32 %v1026, 0.0
        %v1109 = vmax.f32 %v1031, 0.0
        %v1110 = vmax.f32 %v1036, 0.0
        %v1111 = vmax.f32 %v1041, 0.0
        %v1112 = vmax.f32 %v1046, 0.0
        %v1113 = vmax.f32 %v1051, 0.0
        %v1114 = vmax.f32 %v1056, 0.0
        %v1115 = vmax.f32 %v1061, 0.0
        %v1116 = vmax.f32 %v1066, 0.0
        %v1117 = vmax.f32 %v1071, 0.0
        %v1118 = vmax.f32 %v1076, 0.0
        %v1119 = vmax.f32 %v1081, 0.0
        %v1120 = vmax.f32 %v1086, 0.0
        %v1121 = vld [vmem:[%s5] sm:$0xff]
        %v1122 = vld [vmem:[%s5 + $0x8] sm:$0xff]
        %v1123 = vld [vmem:[%s5 + $0x10] sm:$0xff]
        %v1124 = vld [vmem:[%s5 + $0x18] sm:$0xff]
        %v1125 = vld [vmem:[%s6] sm:$0x1]
        %v1127 = vlaneseq
        %v1128 = vshrl.u32 %v1127, 7
        %v1129 = vsub.s32 0, %v1128
        %v1130 = vrot.slane %v1125, %v1129
        %vm1132 = vcmask 261120
        %v1134 = vsel %vm1132, %v1089, 0
        %v1137 = vsel %vm1132, %v1090, 0
        %v1140 = vsel %vm1132, %v1091, 0
        %v1143 = vsel %vm1132, %v1092, 0
        %v1146 = vsel %vm1132, %v1093, 0
        %v1149 = vsel %vm1132, %v1094, 0
        %v1152 = vsel %vm1132, %v1095, 0
        %v1155 = vsel %vm1132, %v1096, 0
        %v1158 = vsel %vm1132, %v1097, 0
        %v1161 = vsel %vm1132, %v1098, 0
        %v1164 = vsel %vm1132, %v1099, 0
        %v1167 = vsel %vm1132, %v1100, 0
        %v1170 = vsel %vm1132, %v1101, 0
        %v1173 = vsel %vm1132, %v1102, 0
        %v1176 = vsel %vm1132, %v1103, 0
        %v1179 = vsel %vm1132, %v1104, 0
        %v1182 = vsel %vm1132, %v1105, 0
        %v1185 = vsel %vm1132, %v1106, 0
        %v1188 = vsel %vm1132, %v1107, 0
        %v1191 = vsel %vm1132, %v1108, 0
        %v1194 = vsel %vm1132, %v1109, 0
        %v1197 = vsel %vm1132, %v1110, 0
        %v1200 = vsel %vm1132, %v1111, 0
        %v1203 = vsel %vm1132, %v1112, 0
        %v1206 = vsel %vm1132, %v1113, 0
        %v1209 = vsel %vm1132, %v1114, 0
        %v1212 = vsel %vm1132, %v1115, 0
        %v1215 = vsel %vm1132, %v1116, 0
        %v1218 = vsel %vm1132, %v1117, 0
        %v1221 = vsel %vm1132, %v1118, 0
        %v1224 = vsel %vm1132, %v1119, 0
        %v1227 = vsel %vm1132, %v1120, 0
        %1229 = vmatprep.subr.mxu0 0.0
        %1230 = vmatpush1.msra.mxu0 %v1121
        %1231 = vmatprep.subr.mxu0 0.0
        %1232 = vmatpush1.msra.mxu0 %v1122
        %1233 = vmatprep.subr.mxu0 0.0
        %1234 = vmatpush1.msra.mxu0 %v1123
        %1235 = vmatprep.subr.mxu0 0.0
        %1236 = vmatpush1.msra.mxu0 %v1124
        %1237 = vmatprep.subr.mxu0 0.0
        %1238 = vmatpush1.msra.mxu0 0.0
        %1239 = vmatprep.subr.mxu0 0.0
        %1240 = vmatpush1.msra.mxu0 0.0
        %1241 = vmatprep.subr.mxu0 0.0
        %1242 = vmatpush1.msra.mxu0 0.0
        %1243 = vmatprep.subr.mxu0 0.0
        %1244 = vmatpush1.msra.mxu0 0.0
        %1245 = vmatprep.subr.mxu0 0.0
        %1246 = vmatpush1.msra.mxu0 0.0
        %1247 = vmatprep.subr.mxu0 0.0
        %1248 = vmatpush1.msra.mxu0 0.0
        %1249 = vmatprep.subr.mxu0 0.0
        %1250 = vmatpush1.msra.mxu0 0.0
        %1251 = vmatprep.subr.mxu0 0.0
        %1252 = vmatpush1.msra.mxu0 0.0
        %1253 = vmatprep.subr.mxu0 0.0
        %1254 = vmatpush1.msra.mxu0 0.0
        %1255 = vmatprep.subr.mxu0 0.0
        %1256 = vmatpush1.msra.mxu0 0.0
        %1257 = vmatprep.subr.mxu0 0.0
        %1258 = vmatpush1.msra.mxu0 0.0
        %1259 = vmatprep.subr.mxu0 0.0
        %1260 = vmatpush1.msra.mxu0 0.0
        %1261 = vmatprep.subr.mxu0 0.0
        %1262 = vmatpush1.msra.mxu0 0.0
        %1263 = vmatprep.subr.mxu0 0.0
        %1264 = vmatpush1.msra.mxu0 0.0
        %1265 = vmatprep.subr.mxu0 0.0
        %1266 = vmatpush1.msra.mxu0 0.0
        %1267 = vmatprep.subr.mxu0 0.0
        %1268 = vmatpush1.msra.mxu0 0.0
        %1269 = vmatprep.subr.mxu0 0.0
        %1270 = vmatpush1.msra.mxu0 0.0
        %1271 = vmatprep.subr.mxu0 0.0
        %1272 = vmatpush1.msra.mxu0 0.0
        %1273 = vmatprep.subr.mxu0 0.0
        %1274 = vmatpush1.msra.mxu0 0.0
        %1275 = vmatprep.subr.mxu0 0.0
        %1276 = vmatpush1.msra.mxu0 0.0
        %1277 = vmatprep.subr.mxu0 0.0
        %1278 = vmatpush1.msra.mxu0 0.0
        %1279 = vmatprep.subr.mxu0 0.0
        %1280 = vmatpush1.msra.mxu0 0.0
        %1281 = vmatprep.subr.mxu0 0.0
        %1282 = vmatpush1.msra.mxu0 0.0
        %1283 = vmatprep.subr.mxu0 0.0
        %1284 = vmatpush1.msra.mxu0 0.0
        %1285 = vmatprep.subr.mxu0 0.0
        %1286 = vmatpush1.msra.mxu0 0.0
        %1287 = vmatprep.subr.mxu0 0.0
        %1288 = vmatpush1.msra.mxu0 0.0
        %1289 = vmatprep.subr.mxu0 0.0
        %1290 = vmatpush1.msra.mxu0 0.0
        %1291 = vmatprep.subr.mxu0 0.0
        %1292 = vmatpush1.msra.mxu0 0.0
        %1293 = vmatprep.mubr.f32.mxu0 0.0
        %1294 = vmatmul.mubr.f32.gmra.mrb[0].mxu0 %v1134
        %v1295 = vpop.f32.mrb[0].mxu0
        %v1296 = vadd.f32 %v1130, %v1295
        %v1297 = vpop.f32.mrb[0].mxu0
        %1298 = vmatprep.mubr.f32.mxu0 0.0
        %1299 = vmatmul.mubr.f32.gmra.mrb[0].mxu0 %v1137
        %v1300 = vpop.f32.mrb[0].mxu0
        %v1301 = vadd.f32 %v1130, %v1300
        %v1302 = vpop.f32.mrb[0].mxu0
        %1303 = vmatprep.mubr.f32.mxu0 0.0
        %1304 = vmatmul.mubr.f32.gmra.mrb[0].mxu0 %v1140
        %v1305 = vpop.f32.mrb[0].mxu0
        %v1306 = vadd.f32 %v1130, %v1305
        %v1307 = vpop.f32.mrb[0].mxu0
        %1308 = vmatprep.mubr.f32.mxu0 0.0
        %1309 = vmatmul.mubr.f32.gmra.mrb[0].mxu0 %v1143
        %v1310 = vpop.f32.mrb[0].mxu0
        %v1311 = vadd.f32 %v1130, %v1310
        %v1312 = vpop.f32.mrb[0].mxu0
        %1313 = vmatprep.mubr.f32.mxu0 0.0
        %1314 = vmatmul.mubr.f32.gmra.mrb[0].mxu0 %v1146
        %v1315 = vpop.f32.mrb[0].mxu0
        %v1316 = vadd.f32 %v1130, %v1315
        %v1317 = vpop.f32.mrb[0].mxu0
        %1318 = vmatprep.mubr.f32.mxu0 0.0
        %1319 = vmatmul.mubr.f32.gmra.mrb[0].mxu0 %v1149
        %v1320 = vpop.f32.mrb[0].mxu0
        %v1321 = vadd.f32 %v1130, %v1320
        %v1322 = vpop.f32.mrb[0].mxu0
        %1323 = vmatprep.mubr.f32.mxu0 0.0
        %1324 = vmatmul.mubr.f32.gmra.mrb[0].mxu0 %v1152
        %v1325 = vpop.f32.mrb[0].mxu0
        %v1326 = vadd.f32 %v1130, %v1325
        %v1327 = vpop.f32.mrb[0].mxu0
        %1328 = vmatprep.mubr.f32.mxu0 0.0
        %1329 = vmatmul.mubr.f32.gmra.mrb[0].mxu0 %v1155
        %v1330 = vpop.f32.mrb[0].mxu0
        %v1331 = vadd.f32 %v1130, %v1330
        %v1332 = vpop.f32.mrb[0].mxu0
        %1333 = vmatprep.mubr.f32.mxu0 0.0
        %1334 = vmatmul.mubr.f32.gmra.mrb[0].mxu0 %v1158
        %v1335 = vpop.f32.mrb[0].mxu0
        %v1336 = vadd.f32 %v1130, %v1335
        %v1337 = vpop.f32.mrb[0].mxu0
        %1338 = vmatprep.mubr.f32.mxu0 0.0
        %1339 = vmatmul.mubr.f32.gmra.mrb[0].mxu0 %v1161
        %v1340 = vpop.f32.mrb[0].mxu0
        %v1341 = vadd.f32 %v1130, %v1340
        %v1342 = vpop.f32.mrb[0].mxu0
        %1343 = vmatprep.mubr.f32.mxu0 0.0
        %1344 = vmatmul.mubr.f32.gmra.mrb[0].mxu0 %v1164
        %v1345 = vpop.f32.mrb[0].mxu0
        %v1346 = vadd.f32 %v1130, %v1345
        %v1347 = vpop.f32.mrb[0].mxu0
        %1348 = vmatprep.mubr.f32.mxu0 0.0
        %1349 = vmatmul.mubr.f32.gmra.mrb[0].mxu0 %v1167
        %v1350 = vpop.f32.mrb[0].mxu0
        %v1351 = vadd.f32 %v1130, %v1350
        %v1352 = vpop.f32.mrb[0].mxu0
        %1353 = vmatprep.mubr.f32.mxu0 0.0
        %1354 = vmatmul.mubr.f32.gmra.mrb[0].mxu0 %v1170
        %v1355 = vpop.f32.mrb[0].mxu0
        %v1356 = vadd.f32 %v1130, %v1355
        %v1357 = vpop.f32.mrb[0].mxu0
        %1358 = vmatprep.mubr.f32.mxu0 0.0
        %1359 = vmatmul.mubr.f32.gmra.mrb[0].mxu0 %v1173
        %v1360 = vpop.f32.mrb[0].mxu0
        %v1361 = vadd.f32 %v1130, %v1360
        %v1362 = vpop.f32.mrb[0].mxu0
        %1363 = vmatprep.mubr.f32.mxu0 0.0
        %1364 = vmatmul.mubr.f32.gmra.mrb[0].mxu0 %v1176
        %v1365 = vpop.f32.mrb[0].mxu0
        %v1366 = vadd.f32 %v1130, %v1365
        %v1367 = vpop.f32.mrb[0].mxu0
        %1368 = vmatprep.mubr.f32.mxu0 0.0
        %1369 = vmatmul.mubr.f32.gmra.mrb[0].mxu0 %v1179
        %v1370 = vpop.f32.mrb[0].mxu0
        %v1371 = vadd.f32 %v1130, %v1370
        %v1372 = vpop.f32.mrb[0].mxu0
        %1373 = vmatprep.mubr.f32.mxu0 0.0
        %1374 = vmatmul.mubr.f32.gmra.mrb[0].mxu0 %v1182
        %v1375 = vpop.f32.mrb[0].mxu0
        %v1376 = vadd.f32 %v1130, %v1375
        %v1377 = vpop.f32.mrb[0].mxu0
        %1378 = vmatprep.mubr.f32.mxu0 0.0
        %1379 = vmatmul.mubr.f32.gmra.mrb[0].mxu0 %v1185
        %v1380 = vpop.f32.mrb[0].mxu0
        %v1381 = vadd.f32 %v1130, %v1380
        %v1382 = vpop.f32.mrb[0].mxu0
        %1383 = vmatprep.mubr.f32.mxu0 0.0
        %1384 = vmatmul.mubr.f32.gmra.mrb[0].mxu0 %v1188
        %v1385 = vpop.f32.mrb[0].mxu0
        %v1386 = vadd.f32 %v1130, %v1385
        %v1387 = vpop.f32.mrb[0].mxu0
        %1388 = vmatprep.mubr.f32.mxu0 0.0
        %1389 = vmatmul.mubr.f32.gmra.mrb[0].mxu0 %v1191
        %v1390 = vpop.f32.mrb[0].mxu0
        %v1391 = vadd.f32 %v1130, %v1390
        %v1392 = vpop.f32.mrb[0].mxu0
        %1393 = vmatprep.mubr.f32.mxu0 0.0
        %1394 = vmatmul.mubr.f32.gmra.mrb[0].mxu0 %v1194
        %v1395 = vpop.f32.mrb[0].mxu0
        %v1396 = vadd.f32 %v1130, %v1395
        %v1397 = vpop.f32.mrb[0].mxu0
        %1398 = vmatprep.mubr.f32.mxu0 0.0
        %1399 = vmatmul.mubr.f32.gmra.mrb[0].mxu0 %v1197
        %v1400 = vpop.f32.mrb[0].mxu0
        %v1401 = vadd.f32 %v1130, %v1400
        %v1402 = vpop.f32.mrb[0].mxu0
        %1403 = vmatprep.mubr.f32.mxu0 0.0
        %1404 = vmatmul.mubr.f32.gmra.mrb[0].mxu0 %v1200
        %v1405 = vpop.f32.mrb[0].mxu0
        %v1406 = vadd.f32 %v1130, %v1405
        %v1407 = vpop.f32.mrb[0].mxu0
        %1408 = vmatprep.mubr.f32.mxu0 0.0
        %1409 = vmatmul.mubr.f32.gmra.mrb[0].mxu0 %v1203
        %v1410 = vpop.f32.mrb[0].mxu0
        %v1411 = vadd.f32 %v1130, %v1410
        %v1412 = vpop.f32.mrb[0].mxu0
        %1413 = vmatprep.mubr.f32.mxu0 0.0
        %1414 = vmatmul.mubr.f32.gmra.mrb[0].mxu0 %v1206
        %v1415 = vpop.f32.mrb[0].mxu0
        %v1416 = vadd.f32 %v1130, %v1415
        %v1417 = vpop.f32.mrb[0].mxu0
        %1418 = vmatprep.mubr.f32.mxu0 0.0
        %1419 = vmatmul.mubr.f32.gmra.mrb[0].mxu0 %v1209
        %v1420 = vpop.f32.mrb[0].mxu0
        %v1421 = vadd.f32 %v1130, %v1420
        %v1422 = vpop.f32.mrb[0].mxu0
        %1423 = vmatprep.mubr.f32.mxu0 0.0
        %1424 = vmatmul.mubr.f32.gmra.mrb[0].mxu0 %v1212
        %v1425 = vpop.f32.mrb[0].mxu0
        %v1426 = vadd.f32 %v1130, %v1425
        %v1427 = vpop.f32.mrb[0].mxu0
        %1428 = vmatprep.mubr.f32.mxu0 0.0
        %1429 = vmatmul.mubr.f32.gmra.mrb[0].mxu0 %v1215
        %v1430 = vpop.f32.mrb[0].mxu0
        %v1431 = vadd.f32 %v1130, %v1430
        %v1432 = vpop.f32.mrb[0].mxu0
        %1433 = vmatprep.mubr.f32.mxu0 0.0
        %1434 = vmatmul.mubr.f32.gmra.mrb[0].mxu0 %v1218
        %v1435 = vpop.f32.mrb[0].mxu0
        %v1436 = vadd.f32 %v1130, %v1435
        %v1437 = vpop.f32.mrb[0].mxu0
        %1438 = vmatprep.mubr.f32.mxu0 0.0
        %1439 = vmatmul.mubr.f32.gmra.mrb[0].mxu0 %v1221
        %v1440 = vpop.f32.mrb[0].mxu0
        %v1441 = vadd.f32 %v1130, %v1440
        %v1442 = vpop.f32.mrb[0].mxu0
        %1443 = vmatprep.mubr.f32.mxu0 0.0
        %1444 = vmatmul.mubr.f32.gmra.mrb[0].mxu0 %v1224
        %v1445 = vpop.f32.mrb[0].mxu0
        %v1446 = vadd.f32 %v1130, %v1445
        %v1447 = vpop.f32.mrb[0].mxu0
        %1448 = vmatprep.mubr.f32.mxu0 0.0
        %1449 = vmatmul.mubr.f32.gmra.mrb[0].mxu0 %v1227
        %v1450 = vpop.f32.mrb[0].mxu0
        %v1451 = vadd.f32 %v1130, %v1450
        %v1452 = vpop.f32.mrb[0].mxu0
        %1453 = vdwg.mxu0
        %v1454 = vmax.f32 %v1296, 0.0
        %v1455 = vmax.f32 %v1301, 0.0
        %v1456 = vmax.f32 %v1306, 0.0
        %v1457 = vmax.f32 %v1311, 0.0
        %v1458 = vmax.f32 %v1316, 0.0
        %v1459 = vmax.f32 %v1321, 0.0
        %v1460 = vmax.f32 %v1326, 0.0
        %v1461 = vmax.f32 %v1331, 0.0
        %v1462 = vmax.f32 %v1336, 0.0
        %v1463 = vmax.f32 %v1341, 0.0
        %v1464 = vmax.f32 %v1346, 0.0
        %v1465 = vmax.f32 %v1351, 0.0
        %v1466 = vmax.f32 %v1356, 0.0
        %v1467 = vmax.f32 %v1361, 0.0
        %v1468 = vmax.f32 %v1366, 0.0
        %v1469 = vmax.f32 %v1371, 0.0
        %v1470 = vmax.f32 %v1376, 0.0
        %v1471 = vmax.f32 %v1381, 0.0
        %v1472 = vmax.f32 %v1386, 0.0
        %v1473 = vmax.f32 %v1391, 0.0
        %v1474 = vmax.f32 %v1396, 0.0
        %v1475 = vmax.f32 %v1401, 0.0
        %v1476 = vmax.f32 %v1406, 0.0
        %v1477 = vmax.f32 %v1411, 0.0
        %v1478 = vmax.f32 %v1416, 0.0
        %v1479 = vmax.f32 %v1421, 0.0
        %v1480 = vmax.f32 %v1426, 0.0
        %v1481 = vmax.f32 %v1431, 0.0
        %v1482 = vmax.f32 %v1436, 0.0
        %v1483 = vmax.f32 %v1441, 0.0
        %v1484 = vmax.f32 %v1446, 0.0
        %v1485 = vmax.f32 %v1451, 0.0
        %v1486 = vld [vmem:[%s7] sm:$0xff]
        %v1487 = vld [vmem:[%s7 + $0x8] sm:$0x3]
        %v1488 = vld [vmem:[%s8] sm:$0x1]
        %v1490 = vlaneseq
        %v1491 = vshrl.u32 %v1490, 7
        %v1492 = vsub.s32 0, %v1491
        %v1493 = vrot.slane %v1488, %v1492
        %vm1495 = vcmask 80896
        %v1497 = vsel %vm1495, %v1454, 0
        %v1500 = vsel %vm1495, %v1455, 0
        %v1503 = vsel %vm1495, %v1456, 0
        %v1506 = vsel %vm1495, %v1457, 0
        %v1509 = vsel %vm1495, %v1458, 0
        %v1512 = vsel %vm1495, %v1459, 0
        %v1515 = vsel %vm1495, %v1460, 0
        %v1518 = vsel %vm1495, %v1461, 0
        %v1521 = vsel %vm1495, %v1462, 0
        %v1524 = vsel %vm1495, %v1463, 0
        %v1527 = vsel %vm1495, %v1464, 0
        %v1530 = vsel %vm1495, %v1465, 0
        %v1533 = vsel %vm1495, %v1466, 0
        %v1536 = vsel %vm1495, %v1467, 0
        %v1539 = vsel %vm1495, %v1468, 0
        %v1542 = vsel %vm1495, %v1469, 0
        %v1545 = vsel %vm1495, %v1470, 0
        %v1548 = vsel %vm1495, %v1471, 0
        %v1551 = vsel %vm1495, %v1472, 0
        %v1554 = vsel %vm1495, %v1473, 0
        %v1557 = vsel %vm1495, %v1474, 0
        %v1560 = vsel %vm1495, %v1475, 0
        %v1563 = vsel %vm1495, %v1476, 0
        %v1566 = vsel %vm1495, %v1477, 0
        %v1569 = vsel %vm1495, %v1478, 0
        %v1572 = vsel %vm1495, %v1479, 0
        %v1575 = vsel %vm1495, %v1480, 0
        %v1578 = vsel %vm1495, %v1481, 0
        %v1581 = vsel %vm1495, %v1482, 0
        %v1584 = vsel %vm1495, %v1483, 0
        %v1587 = vsel %vm1495, %v1484, 0
        %v1590 = vsel %vm1495, %v1485, 0
        %vm1592 = vcmask 1041408
        %v1594 = vsel %vm1592, %v1487, 0
        %1596 = vmatprep.subr.mxu0 0.0
        %1597 = vmatpush1.msra.mxu0 %v1486
        %1598 = vmatprep.subr.mxu0 0.0
        %1599 = vmatpush1.msra.mxu0 %v1594
        %1600 = vmatprep.subr.mxu0 0.0
        %1601 = vmatpush1.msra.mxu0 0.0
        %1602 = vmatprep.subr.mxu0 0.0
        %1603 = vmatpush1.msra.mxu0 0.0
        %1604 = vmatprep.subr.mxu0 0.0
        %1605 = vmatpush1.msra.mxu0 0.0
        %1606 = vmatprep.subr.mxu0 0.0
        %1607 = vmatpush1.msra.mxu0 0.0
        %1608 = vmatprep.subr.mxu0 0.0
        %1609 = vmatpush1.msra.mxu0 0.0
        %1610 = vmatprep.subr.mxu0 0.0
        %1611 = vmatpush1.msra.mxu0 0.0
        %1612 = vmatprep.subr.mxu0 0.0
        %1613 = vmatpush1.msra.mxu0 0.0
        %1614 = vmatprep.subr.mxu0 0.0
        %1615 = vmatpush1.msra.mxu0 0.0
        %1616 = vmatprep.subr.mxu0 0.0
        %1617 = vmatpush1.msra.mxu0 0.0
        %1618 = vmatprep.subr.mxu0 0.0
        %1619 = vmatpush1.msra.mxu0 0.0
        %1620 = vmatprep.subr.mxu0 0.0
        %1621 = vmatpush1.msra.mxu0 0.0
        %1622 = vmatprep.subr.mxu0 0.0
        %1623 = vmatpush1.msra.mxu0 0.0
        %1624 = vmatprep.subr.mxu0 0.0
        %1625 = vmatpush1.msra.mxu0 0.0
        %1626 = vmatprep.subr.mxu0 0.0
        %1627 = vmatpush1.msra.mxu0 0.0
        %1628 = vmatprep.subr.mxu0 0.0
        %1629 = vmatpush1.msra.mxu0 0.0
        %1630 = vmatprep.subr.mxu0 0.0
        %1631 = vmatpush1.msra.mxu0 0.0
        %1632 = vmatprep.subr.mxu0 0.0
        %1633 = vmatpush1.msra.mxu0 0.0
        %1634 = vmatprep.subr.mxu0 0.0
        %1635 = vmatpush1.msra.mxu0 0.0
        %1636 = vmatprep.subr.mxu0 0.0
        %1637 = vmatpush1.msra.mxu0 0.0
        %1638 = vmatprep.subr.mxu0 0.0
        %1639 = vmatpush1.msra.mxu0 0.0
        %1640 = vmatprep.subr.mxu0 0.0
        %1641 = vmatpush1.msra.mxu0 0.0
        %1642 = vmatprep.subr.mxu0 0.0
        %1643 = vmatpush1.msra.mxu0 0.0
        %1644 = vmatprep.subr.mxu0 0.0
        %1645 = vmatpush1.msra.mxu0 0.0
        %1646 = vmatprep.subr.mxu0 0.0
        %1647 = vmatpush1.msra.mxu0 0.0
        %1648 = vmatprep.subr.mxu0 0.0
        %1649 = vmatpush1.msra.mxu0 0.0
        %1650 = vmatprep.subr.mxu0 0.0
        %1651 = vmatpush1.msra.mxu0 0.0
        %1652 = vmatprep.subr.mxu0 0.0
        %1653 = vmatpush1.msra.mxu0 0.0
        %1654 = vmatprep.subr.mxu0 0.0
        %1655 = vmatpush1.msra.mxu0 0.0
        %1656 = vmatprep.subr.mxu0 0.0
        %1657 = vmatpush1.msra.mxu0 0.0
        %1658 = vmatprep.subr.mxu0 0.0
        %1659 = vmatpush1.msra.mxu0 0.0
        %1660 = vmatprep.mubr.f32.mxu0 0.0
        %1661 = vmatmul.mubr.f32.gmra.mrb[0].mxu0 %v1497
        %v1662 = vpop.f32.mrb[0].mxu0
        %v1663 = vadd.f32 %v1493, %v1662
        %v1664 = vpop.f32.mrb[0].mxu0
        %1665 = vmatprep.mubr.f32.mxu0 0.0
        %1666 = vmatmul.mubr.f32.gmra.mrb[0].mxu0 %v1500
        %v1667 = vpop.f32.mrb[0].mxu0
        %v1668 = vadd.f32 %v1493, %v1667
        %v1669 = vpop.f32.mrb[0].mxu0
        %1670 = vmatprep.mubr.f32.mxu0 0.0
        %1671 = vmatmul.mubr.f32.gmra.mrb[0].mxu0 %v1503
        %v1672 = vpop.f32.mrb[0].mxu0
        %v1673 = vadd.f32 %v1493, %v1672
        %v1674 = vpop.f32.mrb[0].mxu0
        %1675 = vmatprep.mubr.f32.mxu0 0.0
        %1676 = vmatmul.mubr.f32.gmra.mrb[0].mxu0 %v1506
        %v1677 = vpop.f32.mrb[0].mxu0
        %v1678 = vadd.f32 %v1493, %v1677
        %v1679 = vpop.f32.mrb[0].mxu0
        %1680 = vmatprep.mubr.f32.mxu0 0.0
        %1681 = vmatmul.mubr.f32.gmra.mrb[0].mxu0 %v1509
        %v1682 = vpop.f32.mrb[0].mxu0
        %v1683 = vadd.f32 %v1493, %v1682
        %v1684 = vpop.f32.mrb[0].mxu0
        %1685 = vmatprep.mubr.f32.mxu0 0.0
        %1686 = vmatmul.mubr.f32.gmra.mrb[0].mxu0 %v1512
        %v1687 = vpop.f32.mrb[0].mxu0
        %v1688 = vadd.f32 %v1493, %v1687
        %v1689 = vpop.f32.mrb[0].mxu0
        %1690 = vmatprep.mubr.f32.mxu0 0.0
        %1691 = vmatmul.mubr.f32.gmra.mrb[0].mxu0 %v1515
        %v1692 = vpop.f32.mrb[0].mxu0
        %v1693 = vadd.f32 %v1493, %v1692
        %v1694 = vpop.f32.mrb[0].mxu0
        %1695 = vmatprep.mubr.f32.mxu0 0.0
        %1696 = vmatmul.mubr.f32.gmra.mrb[0].mxu0 %v1518
        %v1697 = vpop.f32.mrb[0].mxu0
        %v1698 = vadd.f32 %v1493, %v1697
        %v1699 = vpop.f32.mrb[0].mxu0
        %1700 = vmatprep.mubr.f32.mxu0 0.0
        %1701 = vmatmul.mubr.f32.gmra.mrb[0].mxu0 %v1521
        %v1702 = vpop.f32.mrb[0].mxu0
        %v1703 = vadd.f32 %v1493, %v1702
        %v1704 = vpop.f32.mrb[0].mxu0
        %1705 = vmatprep.mubr.f32.mxu0 0.0
        %1706 = vmatmul.mubr.f32.gmra.mrb[0].mxu0 %v1524
        %v1707 = vpop.f32.mrb[0].mxu0
        %v1708 = vadd.f32 %v1493, %v1707
        %v1709 = vpop.f32.mrb[0].mxu0
        %1710 = vmatprep.mubr.f32.mxu0 0.0
        %1711 = vmatmul.mubr.f32.gmra.mrb[0].mxu0 %v1527
        %v1712 = vpop.f32.mrb[0].mxu0
        %v1713 = vadd.f32 %v1493, %v1712
        %v1714 = vpop.f32.mrb[0].mxu0
        %1715 = vmatprep.mubr.f32.mxu0 0.0
        %1716 = vmatmul.mubr.f32.gmra.mrb[0].mxu0 %v1530
        %v1717 = vpop.f32.mrb[0].mxu0
        %v1718 = vadd.f32 %v1493, %v1717
        %v1719 = vpop.f32.mrb[0].mxu0
        %1720 = vmatprep.mubr.f32.mxu0 0.0
        %1721 = vmatmul.mubr.f32.gmra.mrb[0].mxu0 %v1533
        %v1722 = vpop.f32.mrb[0].mxu0
        %v1723 = vadd.f32 %v1493, %v1722
        %v1724 = vpop.f32.mrb[0].mxu0
        %1725 = vmatprep.mubr.f32.mxu0 0.0
        %1726 = vmatmul.mubr.f32.gmra.mrb[0].mxu0 %v1536
        %v1727 = vpop.f32.mrb[0].mxu0
        %v1728 = vadd.f32 %v1493, %v1727
        %v1729 = vpop.f32.mrb[0].mxu0
        %1730 = vmatprep.mubr.f32.mxu0 0.0
        %1731 = vmatmul.mubr.f32.gmra.mrb[0].mxu0 %v1539
        %v1732 = vpop.f32.mrb[0].mxu0
        %v1733 = vadd.f32 %v1493, %v1732
        %v1734 = vpop.f32.mrb[0].mxu0
        %1735 = vmatprep.mubr.f32.mxu0 0.0
        %1736 = vmatmul.mubr.f32.gmra.mrb[0].mxu0 %v1542
        %v1737 = vpop.f32.mrb[0].mxu0
        %v1738 = vadd.f32 %v1493, %v1737
        %v1739 = vpop.f32.mrb[0].mxu0
        %1740 = vmatprep.mubr.f32.mxu0 0.0
        %1741 = vmatmul.mubr.f32.gmra.mrb[0].mxu0 %v1545
        %v1742 = vpop.f32.mrb[0].mxu0
        %v1743 = vadd.f32 %v1493, %v1742
        %v1744 = vpop.f32.mrb[0].mxu0
        %1745 = vmatprep.mubr.f32.mxu0 0.0
        %1746 = vmatmul.mubr.f32.gmra.mrb[0].mxu0 %v1548
        %v1747 = vpop.f32.mrb[0].mxu0
        %v1748 = vadd.f32 %v1493, %v1747
        %v1749 = vpop.f32.mrb[0].mxu0
        %1750 = vmatprep.mubr.f32.mxu0 0.0
        %1751 = vmatmul.mubr.f32.gmra.mrb[0].mxu0 %v1551
        %v1752 = vpop.f32.mrb[0].mxu0
        %v1753 = vadd.f32 %v1493, %v1752
        %v1754 = vpop.f32.mrb[0].mxu0
        %1755 = vmatprep.mubr.f32.mxu0 0.0
        %1756 = vmatmul.mubr.f32.gmra.mrb[0].mxu0 %v1554
        %v1757 = vpop.f32.mrb[0].mxu0
        %v1758 = vadd.f32 %v1493, %v1757
        %v1759 = vpop.f32.mrb[0].mxu0
        %1760 = vmatprep.mubr.f32.mxu0 0.0
        %1761 = vmatmul.mubr.f32.gmra.mrb[0].mxu0 %v1557
        %v1762 = vpop.f32.mrb[0].mxu0
        %v1763 = vadd.f32 %v1493, %v1762
        %v1764 = vpop.f32.mrb[0].mxu0
        %1765 = vmatprep.mubr.f32.mxu0 0.0
        %1766 = vmatmul.mubr.f32.gmra.mrb[0].mxu0 %v1560
        %v1767 = vpop.f32.mrb[0].mxu0
        %v1768 = vadd.f32 %v1493, %v1767
        %v1769 = vpop.f32.mrb[0].mxu0
        %1770 = vmatprep.mubr.f32.mxu0 0.0
        %1771 = vmatmul.mubr.f32.gmra.mrb[0].mxu0 %v1563
        %v1772 = vpop.f32.mrb[0].mxu0
        %v1773 = vadd.f32 %v1493, %v1772
        %v1774 = vpop.f32.mrb[0].mxu0
        %1775 = vmatprep.mubr.f32.mxu0 0.0
        %1776 = vmatmul.mubr.f32.gmra.mrb[0].mxu0 %v1566
        %v1777 = vpop.f32.mrb[0].mxu0
        %v1778 = vadd.f32 %v1493, %v1777
        %v1779 = vpop.f32.mrb[0].mxu0
        %1780 = vmatprep.mubr.f32.mxu0 0.0
        %1781 = vmatmul.mubr.f32.gmra.mrb[0].mxu0 %v1569
        %v1782 = vpop.f32.mrb[0].mxu0
        %v1783 = vadd.f32 %v1493, %v1782
        %v1784 = vpop.f32.mrb[0].mxu0
        %1785 = vmatprep.mubr.f32.mxu0 0.0
        %1786 = vmatmul.mubr.f32.gmra.mrb[0].mxu0 %v1572
        %v1787 = vpop.f32.mrb[0].mxu0
        %v1788 = vadd.f32 %v1493, %v1787
        %v1789 = vpop.f32.mrb[0].mxu0
        %1790 = vmatprep.mubr.f32.mxu0 0.0
        %1791 = vmatmul.mubr.f32.gmra.mrb[0].mxu0 %v1575
        %v1792 = vpop.f32.mrb[0].mxu0
        %v1793 = vadd.f32 %v1493, %v1792
        %v1794 = vpop.f32.mrb[0].mxu0
        %1795 = vmatprep.mubr.f32.mxu0 0.0
        %1796 = vmatmul.mubr.f32.gmra.mrb[0].mxu0 %v1578
        %v1797 = vpop.f32.mrb[0].mxu0
        %v1798 = vadd.f32 %v1493, %v1797
        %v1799 = vpop.f32.mrb[0].mxu0
        %1800 = vmatprep.mubr.f32.mxu0 0.0
        %1801 = vmatmul.mubr.f32.gmra.mrb[0].mxu0 %v1581
        %v1802 = vpop.f32.mrb[0].mxu0
        %v1803 = vadd.f32 %v1493, %v1802
        %v1804 = vpop.f32.mrb[0].mxu0
        %1805 = vmatprep.mubr.f32.mxu0 0.0
        %1806 = vmatmul.mubr.f32.gmra.mrb[0].mxu0 %v1584
        %v1807 = vpop.f32.mrb[0].mxu0
        %v1808 = vadd.f32 %v1493, %v1807
        %v1809 = vpop.f32.mrb[0].mxu0
        %1810 = vmatprep.mubr.f32.mxu0 0.0
        %1811 = vmatmul.mubr.f32.gmra.mrb[0].mxu0 %v1587
        %v1812 = vpop.f32.mrb[0].mxu0
        %v1813 = vadd.f32 %v1493, %v1812
        %v1814 = vpop.f32.mrb[0].mxu0
        %1815 = vmatprep.mubr.f32.mxu0 0.0
        %1816 = vmatmul.mubr.f32.gmra.mrb[0].mxu0 %v1590
        %v1817 = vpop.f32.mrb[0].mxu0
        %v1818 = vadd.f32 %v1493, %v1817
        %v1819 = vpop.f32.mrb[0].mxu0
        %1820 = vdwg.mxu0
        %v1821 = vmax.f32 %v1663, 0.0
        %v1822 = vmax.f32 %v1668, 0.0
        %v1823 = vmax.f32 %v1673, 0.0
        %v1824 = vmax.f32 %v1678, 0.0
        %v1825 = vmax.f32 %v1683, 0.0
        %v1826 = vmax.f32 %v1688, 0.0
        %v1827 = vmax.f32 %v1693, 0.0
        %v1828 = vmax.f32 %v1698, 0.0
        %v1829 = vmax.f32 %v1703, 0.0
        %v1830 = vmax.f32 %v1708, 0.0
        %v1831 = vmax.f32 %v1713, 0.0
        %v1832 = vmax.f32 %v1718, 0.0
        %v1833 = vmax.f32 %v1723, 0.0
        %v1834 = vmax.f32 %v1728, 0.0
        %v1835 = vmax.f32 %v1733, 0.0
        %v1836 = vmax.f32 %v1738, 0.0
        %v1837 = vmax.f32 %v1743, 0.0
        %v1838 = vmax.f32 %v1748, 0.0
        %v1839 = vmax.f32 %v1753, 0.0
        %v1840 = vmax.f32 %v1758, 0.0
        %v1841 = vmax.f32 %v1763, 0.0
        %v1842 = vmax.f32 %v1768, 0.0
        %v1843 = vmax.f32 %v1773, 0.0
        %v1844 = vmax.f32 %v1778, 0.0
        %v1845 = vmax.f32 %v1783, 0.0
        %v1846 = vmax.f32 %v1788, 0.0
        %v1847 = vmax.f32 %v1793, 0.0
        %v1848 = vmax.f32 %v1798, 0.0
        %v1849 = vmax.f32 %v1803, 0.0
        %v1850 = vmax.f32 %v1808, 0.0
        %v1851 = vmax.f32 %v1813, 0.0
        %v1852 = vmax.f32 %v1818, 0.0
        %vm1853 = vcmask 23552
        %v1854 = vsel %vm1853, %v1821, -inf
        %1855 = vmax.xlane.f32.xlu0 %v1854
        %v1856 = vpop.xlane.xlu0 %1855
        %v1857 = vsel %vm1853, %v1822, -inf
        %1858 = vmax.xlane.f32.xlu0 %v1857
        %v1859 = vpop.xlane.xlu0 %1858
        %v1860 = vsel %vm1853, %v1823, -inf
        %1861 = vmax.xlane.f32.xlu0 %v1860
        %v1862 = vpop.xlane.xlu0 %1861
        %v1863 = vsel %vm1853, %v1824, -inf
        %1864 = vmax.xlane.f32.xlu0 %v1863
        %v1865 = vpop.xlane.xlu0 %1864
        %v1866 = vsel %vm1853, %v1825, -inf
        %1867 = vmax.xlane.f32.xlu0 %v1866
        %v1868 = vpop.xlane.xlu0 %1867
        %v1869 = vsel %vm1853, %v1826, -inf
        %1870 = vmax.xlane.f32.xlu0 %v1869
        %v1871 = vpop.xlane.xlu0 %1870
        %v1872 = vsel %vm1853, %v1827, -inf
        %1873 = vmax.xlane.f32.xlu0 %v1872
        %v1874 = vpop.xlane.xlu0 %1873
        %v1875 = vsel %vm1853, %v1828, -inf
        %1876 = vmax.xlane.f32.xlu0 %v1875
        %v1877 = vpop.xlane.xlu0 %1876
        %v1878 = vsel %vm1853, %v1829, -inf
        %1879 = vmax.xlane.f32.xlu0 %v1878
        %v1880 = vpop.xlane.xlu0 %1879
        %v1881 = vsel %vm1853, %v1830, -inf
        %1882 = vmax.xlane.f32.xlu0 %v1881
        %v1883 = vpop.xlane.xlu0 %1882
        %v1884 = vsel %vm1853, %v1831, -inf
        %1885 = vmax.xlane.f32.xlu0 %v1884
        %v1886 = vpop.xlane.xlu0 %1885
        %v1887 = vsel %vm1853, %v1832, -inf
        %1888 = vmax.xlane.f32.xlu0 %v1887
        %v1889 = vpop.xlane.xlu0 %1888
        %v1890 = vsel %vm1853, %v1833, -inf
        %1891 = vmax.xlane.f32.xlu0 %v1890
        %v1892 = vpop.xlane.xlu0 %1891
        %v1893 = vsel %vm1853, %v1834, -inf
        %1894 = vmax.xlane.f32.xlu0 %v1893
        %v1895 = vpop.xlane.xlu0 %1894
        %v1896 = vsel %vm1853, %v1835, -inf
        %1897 = vmax.xlane.f32.xlu0 %v1896
        %v1898 = vpop.xlane.xlu0 %1897
        %v1899 = vsel %vm1853, %v1836, -inf
        %1900 = vmax.xlane.f32.xlu0 %v1899
        %v1901 = vpop.xlane.xlu0 %1900
        %v1902 = vsel %vm1853, %v1837, -inf
        %1903 = vmax.xlane.f32.xlu0 %v1902
        %v1904 = vpop.xlane.xlu0 %1903
        %v1905 = vsel %vm1853, %v1838, -inf
        %1906 = vmax.xlane.f32.xlu0 %v1905
        %v1907 = vpop.xlane.xlu0 %1906
        %v1908 = vsel %vm1853, %v1839, -inf
        %1909 = vmax.xlane.f32.xlu0 %v1908
        %v1910 = vpop.xlane.xlu0 %1909
        %v1911 = vsel %vm1853, %v1840, -inf
        %1912 = vmax.xlane.f32.xlu0 %v1911
        %v1913 = vpop.xlane.xlu0 %1912
        %v1914 = vsel %vm1853, %v1841, -inf
        %1915 = vmax.xlane.f32.xlu0 %v1914
        %v1916 = vpop.xlane.xlu0 %1915
        %v1917 = vsel %vm1853, %v1842, -inf
        %1918 = vmax.xlane.f32.xlu0 %v1917
        %v1919 = vpop.xlane.xlu0 %1918
        %v1920 = vsel %vm1853, %v1843, -inf
        %1921 = vmax.xlane.f32.xlu0 %v1920
        %v1922 = vpop.xlane.xlu0 %1921
        %v1923 = vsel %vm1853, %v1844, -inf
        %1924 = vmax.xlane.f32.xlu0 %v1923
        %v1925 = vpop.xlane.xlu0 %1924
        %v1926 = vsel %vm1853, %v1845, -inf
        %1927 = vmax.xlane.f32.xlu0 %v1926
        %v1928 = vpop.xlane.xlu0 %1927
        %v1929 = vsel %vm1853, %v1846, -inf
        %1930 = vmax.xlane.f32.xlu0 %v1929
        %v1931 = vpop.xlane.xlu0 %1930
        %v1932 = vsel %vm1853, %v1847, -inf
        %1933 = vmax.xlane.f32.xlu0 %v1932
        %v1934 = vpop.xlane.xlu0 %1933
        %v1935 = vsel %vm1853, %v1848, -inf
        %1936 = vmax.xlane.f32.xlu0 %v1935
        %v1937 = vpop.xlane.xlu0 %1936
        %v1938 = vsel %vm1853, %v1849, -inf
        %1939 = vmax.xlane.f32.xlu0 %v1938
        %v1940 = vpop.xlane.xlu0 %1939
        %v1941 = vsel %vm1853, %v1850, -inf
        %1942 = vmax.xlane.f32.xlu0 %v1941
        %v1943 = vpop.xlane.xlu0 %1942
        %v1944 = vsel %vm1853, %v1851, -inf
        %1945 = vmax.xlane.f32.xlu0 %v1944
        %v1946 = vpop.xlane.xlu0 %1945
        %v1947 = vsel %vm1853, %v1852, -inf
        %1948 = vmax.xlane.f32.xlu0 %v1947
        %v1949 = vpop.xlane.xlu0 %1948
        %v1950 = vsub.f32 %v1821, %v1856
        %v1951 = vsub.f32 %v1822, %v1859
        %v1952 = vsub.f32 %v1823, %v1862
        %v1953 = vsub.f32 %v1824, %v1865
        %v1954 = vsub.f32 %v1825, %v1868
        %v1955 = vsub.f32 %v1826, %v1871
        %v1956 = vsub.f32 %v1827, %v1874
        %v1957 = vsub.f32 %v1828, %v1877
        %v1958 = vsub.f32 %v1829, %v1880
        %v1959 = vsub.f32 %v1830, %v1883
        %v1960 = vsub.f32 %v1831, %v1886
        %v1961 = vsub.f32 %v1832, %v1889
        %v1962 = vsub.f32 %v1833, %v1892
        %v1963 = vsub.f32 %v1834, %v1895
        %v1964 = vsub.f32 %v1835, %v1898
        %v1965 = vsub.f32 %v1836, %v1901
        %v1966 = vsub.f32 %v1837, %v1904
        %v1967 = vsub.f32 %v1838, %v1907
        %v1968 = vsub.f32 %v1839, %v1910
        %v1969 = vsub.f32 %v1840, %v1913
        %v1970 = vsub.f32 %v1841, %v1916
        %v1971 = vsub.f32 %v1842, %v1919
        %v1972 = vsub.f32 %v1843, %v1922
        %v1973 = vsub.f32 %v1844, %v1925
        %v1974 = vsub.f32 %v1845, %v1928
        %v1975 = vsub.f32 %v1846, %v1931
        %v1976 = vsub.f32 %v1847, %v1934
        %v1977 = vsub.f32 %v1848, %v1937
        %v1978 = vsub.f32 %v1849, %v1940
        %v1979 = vsub.f32 %v1850, %v1943
        %v1980 = vsub.f32 %v1851, %v1946
        %v1981 = vsub.f32 %v1852, %v1949
        %v1982 = vmul.f32 %v1950, 1.442695
        %v1983 = vpow.pop %v1982
        %v1984 = vmul.f32 %v1951, 1.442695
        %v1985 = vpow.pop %v1984
        %v1986 = vmul.f32 %v1952, 1.442695
        %v1987 = vpow.pop %v1986
        %v1988 = vmul.f32 %v1953, 1.442695
        %v1989 = vpow.pop %v1988
        %v1990 = vmul.f32 %v1954, 1.442695
        %v1991 = vpow.pop %v1990
        %v1992 = vmul.f32 %v1955, 1.442695
        %v1993 = vpow.pop %v1992
        %v1994 = vmul.f32 %v1956, 1.442695
        %v1995 = vpow.pop %v1994
        %v1996 = vmul.f32 %v1957, 1.442695
        %v1997 = vpow.pop %v1996
        %v1998 = vmul.f32 %v1958, 1.442695
        %v1999 = vpow.pop %v1998
        %v2000 = vmul.f32 %v1959, 1.442695
        %v2001 = vpow.pop %v2000
        %v2002 = vmul.f32 %v1960, 1.442695
        %v2003 = vpow.pop %v2002
        %v2004 = vmul.f32 %v1961, 1.442695
        %v2005 = vpow.pop %v2004
        %v2006 = vmul.f32 %v1962, 1.442695
        %v2007 = vpow.pop %v2006
        %v2008 = vmul.f32 %v1963, 1.442695
        %v2009 = vpow.pop %v2008
        %v2010 = vmul.f32 %v1964, 1.442695
        %v2011 = vpow.pop %v2010
        %v2012 = vmul.f32 %v1965, 1.442695
        %v2013 = vpow.pop %v2012
        %v2014 = vmul.f32 %v1966, 1.442695
        %v2015 = vpow.pop %v2014
        %v2016 = vmul.f32 %v1967, 1.442695
        %v2017 = vpow.pop %v2016
        %v2018 = vmul.f32 %v1968, 1.442695
        %v2019 = vpow.pop %v2018
        %v2020 = vmul.f32 %v1969, 1.442695
        %v2021 = vpow.pop %v2020
        %v2022 = vmul.f32 %v1970, 1.442695
        %v2023 = vpow.pop %v2022
        %v2024 = vmul.f32 %v1971, 1.442695
        %v2025 = vpow.pop %v2024
        %v2026 = vmul.f32 %v1972, 1.442695
        %v2027 = vpow.pop %v2026
        %v2028 = vmul.f32 %v1973, 1.442695
        %v2029 = vpow.pop %v2028
        %v2030 = vmul.f32 %v1974, 1.442695
        %v2031 = vpow.pop %v2030
        %v2032 = vmul.f32 %v1975, 1.442695
        %v2033 = vpow.pop %v2032
        %v2034 = vmul.f32 %v1976, 1.442695
        %v2035 = vpow.pop %v2034
        %v2036 = vmul.f32 %v1977, 1.442695
        %v2037 = vpow.pop %v2036
        %v2038 = vmul.f32 %v1978, 1.442695
        %v2039 = vpow.pop %v2038
        %v2040 = vmul.f32 %v1979, 1.442695
        %v2041 = vpow.pop %v2040
        %v2042 = vmul.f32 %v1980, 1.442695
        %v2043 = vpow.pop %v2042
        %v2044 = vmul.f32 %v1981, 1.442695
        %v2045 = vpow.pop %v2044
        %v2046 = vsel %vm1853, %v1983, 0.0
        %2047 = vadd.xlane.f32.xlu0 %v2046
        %v2048 = vpop.xlane.xlu0 %2047
        %v2049 = vsel %vm1853, %v1985, 0.0
        %2050 = vadd.xlane.f32.xlu0 %v2049
        %v2051 = vpop.xlane.xlu0 %2050
        %v2052 = vsel %vm1853, %v1987, 0.0
        %2053 = vadd.xlane.f32.xlu0 %v2052
        %v2054 = vpop.xlane.xlu0 %2053
        %v2055 = vsel %vm1853, %v1989, 0.0
        %2056 = vadd.xlane.f32.xlu0 %v2055
        %v2057 = vpop.xlane.xlu0 %2056
        %v2058 = vsel %vm1853, %v1991, 0.0
        %2059 = vadd.xlane.f32.xlu0 %v2058
        %v2060 = vpop.xlane.xlu0 %2059
        %v2061 = vsel %vm1853, %v1993, 0.0
        %2062 = vadd.xlane.f32.xlu0 %v2061
        %v2063 = vpop.xlane.xlu0 %2062
        %v2064 = vsel %vm1853, %v1995, 0.0
        %2065 = vadd.xlane.f32.xlu0 %v2064
        %v2066 = vpop.xlane.xlu0 %2065
        %v2067 = vsel %vm1853, %v1997, 0.0
        %2068 = vadd.xlane.f32.xlu0 %v2067
        %v2069 = vpop.xlane.xlu0 %2068
        %v2070 = vsel %vm1853, %v1999, 0.0
        %2071 = vadd.xlane.f32.xlu0 %v2070
        %v2072 = vpop.xlane.xlu0 %2071
        %v2073 = vsel %vm1853, %v2001, 0.0
        %2074 = vadd.xlane.f32.xlu0 %v2073
        %v2075 = vpop.xlane.xlu0 %2074
        %v2076 = vsel %vm1853, %v2003, 0.0
        %2077 = vadd.xlane.f32.xlu0 %v2076
        %v2078 = vpop.xlane.xlu0 %2077
        %v2079 = vsel %vm1853, %v2005, 0.0
        %2080 = vadd.xlane.f32.xlu0 %v2079
        %v2081 = vpop.xlane.xlu0 %2080
        %v2082 = vsel %vm1853, %v2007, 0.0
        %2083 = vadd.xlane.f32.xlu0 %v2082
        %v2084 = vpop.xlane.xlu0 %2083
        %v2085 = vsel %vm1853, %v2009, 0.0
        %2086 = vadd.xlane.f32.xlu0 %v2085
        %v2087 = vpop.xlane.xlu0 %2086
        %v2088 = vsel %vm1853, %v2011, 0.0
        %2089 = vadd.xlane.f32.xlu0 %v2088
        %v2090 = vpop.xlane.xlu0 %2089
        %v2091 = vsel %vm1853, %v2013, 0.0
        %2092 = vadd.xlane.f32.xlu0 %v2091
        %v2093 = vpop.xlane.xlu0 %2092
        %v2094 = vsel %vm1853, %v2015, 0.0
        %2095 = vadd.xlane.f32.xlu0 %v2094
        %v2096 = vpop.xlane.xlu0 %2095
        %v2097 = vsel %vm1853, %v2017, 0.0
        %2098 = vadd.xlane.f32.xlu0 %v2097
        %v2099 = vpop.xlane.xlu0 %2098
        %v2100 = vsel %vm1853, %v2019, 0.0
        %2101 = vadd.xlane.f32.xlu0 %v2100
        %v2102 = vpop.xlane.xlu0 %2101
        %v2103 = vsel %vm1853, %v2021, 0.0
        %2104 = vadd.xlane.f32.xlu0 %v2103
        %v2105 = vpop.xlane.xlu0 %2104
        %v2106 = vsel %vm1853, %v2023, 0.0
        %2107 = vadd.xlane.f32.xlu0 %v2106
        %v2108 = vpop.xlane.xlu0 %2107
        %v2109 = vsel %vm1853, %v2025, 0.0
        %2110 = vadd.xlane.f32.xlu0 %v2109
        %v2111 = vpop.xlane.xlu0 %2110
        %v2112 = vsel %vm1853, %v2027, 0.0
        %2113 = vadd.xlane.f32.xlu0 %v2112
        %v2114 = vpop.xlane.xlu0 %2113
        %v2115 = vsel %vm1853, %v2029, 0.0
        %2116 = vadd.xlane.f32.xlu0 %v2115
        %v2117 = vpop.xlane.xlu0 %2116
        %v2118 = vsel %vm1853, %v2031, 0.0
        %2119 = vadd.xlane.f32.xlu0 %v2118
        %v2120 = vpop.xlane.xlu0 %2119
        %v2121 = vsel %vm1853, %v2033, 0.0
        %2122 = vadd.xlane.f32.xlu0 %v2121
        %v2123 = vpop.xlane.xlu0 %2122
        %v2124 = vsel %vm1853, %v2035, 0.0
        %2125 = vadd.xlane.f32.xlu0 %v2124
        %v2126 = vpop.xlane.xlu0 %2125
        %v2127 = vsel %vm1853, %v2037, 0.0
        %2128 = vadd.xlane.f32.xlu0 %v2127
        %v2129 = vpop.xlane.xlu0 %2128
        %v2130 = vsel %vm1853, %v2039, 0.0
        %2131 = vadd.xlane.f32.xlu0 %v2130
        %v2132 = vpop.xlane.xlu0 %2131
        %v2133 = vsel %vm1853, %v2041, 0.0
        %2134 = vadd.xlane.f32.xlu0 %v2133
        %v2135 = vpop.xlane.xlu0 %2134
        %v2136 = vsel %vm1853, %v2043, 0.0
        %2137 = vadd.xlane.f32.xlu0 %v2136
        %v2138 = vpop.xlane.xlu0 %2137
        %v2139 = vsel %vm1853, %v2045, 0.0
        %2140 = vadd.xlane.f32.xlu0 %v2139
        %v2141 = vpop.xlane.xlu0 %2140
        %v2142 = vlog2.pop %v2048
        %v2143 = vmul.f32 %v2142, 0.6931472
        %v2144 = vlog2.pop %v2051
        %v2145 = vmul.f32 %v2144, 0.6931472
        %v2146 = vlog2.pop %v2054
        %v2147 = vmul.f32 %v2146, 0.6931472
        %v2148 = vlog2.pop %v2057
        %v2149 = vmul.f32 %v2148, 0.6931472
        %v2150 = vlog2.pop %v2060
        %v2151 = vmul.f32 %v2150, 0.6931472
        %v2152 = vlog2.pop %v2063
        %v2153 = vmul.f32 %v2152, 0.6931472
        %v2154 = vlog2.pop %v2066
        %v2155 = vmul.f32 %v2154, 0.6931472
        %v2156 = vlog2.pop %v2069
        %v2157 = vmul.f32 %v2156, 0.6931472
        %v2158 = vlog2.pop %v2072
        %v2159 = vmul.f32 %v2158, 0.6931472
        %v2160 = vlog2.pop %v2075
        %v2161 = vmul.f32 %v2160, 0.6931472
        %v2162 = vlog2.pop %v2078
        %v2163 = vmul.f32 %v2162, 0.6931472
        %v2164 = vlog2.pop %v2081
        %v2165 = vmul.f32 %v2164, 0.6931472
        %v2166 = vlog2.pop %v2084
        %v2167 = vmul.f32 %v2166, 0.6931472
        %v2168 = vlog2.pop %v2087
        %v2169 = vmul.f32 %v2168, 0.6931472
        %v2170 = vlog2.pop %v2090
        %v2171 = vmul.f32 %v2170, 0.6931472
        %v2172 = vlog2.pop %v2093
        %v2173 = vmul.f32 %v2172, 0.6931472
        %v2174 = vlog2.pop %v2096
        %v2175 = vmul.f32 %v2174, 0.6931472
        %v2176 = vlog2.pop %v2099
        %v2177 = vmul.f32 %v2176, 0.6931472
        %v2178 = vlog2.pop %v2102
        %v2179 = vmul.f32 %v2178, 0.6931472
        %v2180 = vlog2.pop %v2105
        %v2181 = vmul.f32 %v2180, 0.6931472
        %v2182 = vlog2.pop %v2108
        %v2183 = vmul.f32 %v2182, 0.6931472
        %v2184 = vlog2.pop %v2111
        %v2185 = vmul.f32 %v2184, 0.6931472
        %v2186 = vlog2.pop %v2114
        %v2187 = vmul.f32 %v2186, 0.6931472
        %v2188 = vlog2.pop %v2117
        %v2189 = vmul.f32 %v2188, 0.6931472
        %v2190 = vlog2.pop %v2120
        %v2191 = vmul.f32 %v2190, 0.6931472
        %v2192 = vlog2.pop %v2123
        %v2193 = vmul.f32 %v2192, 0.6931472
        %v2194 = vlog2.pop %v2126
        %v2195 = vmul.f32 %v2194, 0.6931472
        %v2196 = vlog2.pop %v2129
        %v2197 = vmul.f32 %v2196, 0.6931472
        %v2198 = vlog2.pop %v2132
        %v2199 = vmul.f32 %v2198, 0.6931472
        %v2200 = vlog2.pop %v2135
        %v2201 = vmul.f32 %v2200, 0.6931472
        %v2202 = vlog2.pop %v2138
        %v2203 = vmul.f32 %v2202, 0.6931472
        %v2204 = vlog2.pop %v2141
        %v2205 = vmul.f32 %v2204, 0.6931472
        %v2206 = vsub.f32 %v1950, %v2143
        %v2207 = vsub.f32 %v1951, %v2145
        %v2208 = vsub.f32 %v1952, %v2147
        %v2209 = vsub.f32 %v1953, %v2149
        %v2210 = vsub.f32 %v1954, %v2151
        %v2211 = vsub.f32 %v1955, %v2153
        %v2212 = vsub.f32 %v1956, %v2155
        %v2213 = vsub.f32 %v1957, %v2157
        %v2214 = vsub.f32 %v1958, %v2159
        %v2215 = vsub.f32 %v1959, %v2161
        %v2216 = vsub.f32 %v1960, %v2163
        %v2217 = vsub.f32 %v1961, %v2165
        %v2218 = vsub.f32 %v1962, %v2167
        %v2219 = vsub.f32 %v1963, %v2169
        %v2220 = vsub.f32 %v1964, %v2171
        %v2221 = vsub.f32 %v1965, %v2173
        %v2222 = vsub.f32 %v1966, %v2175
        %v2223 = vsub.f32 %v1967, %v2177
        %v2224 = vsub.f32 %v1968, %v2179
        %v2225 = vsub.f32 %v1969, %v2181
        %v2226 = vsub.f32 %v1970, %v2183
        %v2227 = vsub.f32 %v1971, %v2185
        %v2228 = vsub.f32 %v1972, %v2187
        %v2229 = vsub.f32 %v1973, %v2189
        %v2230 = vsub.f32 %v1974, %v2191
        %v2231 = vsub.f32 %v1975, %v2193
        %v2232 = vsub.f32 %v1976, %v2195
        %v2233 = vsub.f32 %v1977, %v2197
        %v2234 = vsub.f32 %v1978, %v2199
        %v2235 = vsub.f32 %v1979, %v2201
        %v2236 = vsub.f32 %v1980, %v2203
        %v2237 = vsub.f32 %v1981, %v2205
        %2238 = vst.msk [vmem:[%s334] sm:$0xff] %vm1853, %v2206
        %2239 = vst.msk [vmem:[%s334 + $0x8] sm:$0xff] %vm1853, %v2207
        %2240 = vst.msk [vmem:[%s334 + $0x10] sm:$0xff] %vm1853, %v2208
        %2241 = vst.msk [vmem:[%s334 + $0x18] sm:$0xff] %vm1853, %v2209
        %2242 = vst.msk [vmem:[%s334 + $0x20] sm:$0xff] %vm1853, %v2210
        %2243 = vst.msk [vmem:[%s334 + $0x28] sm:$0xff] %vm1853, %v2211
        %2244 = vst.msk [vmem:[%s334 + $0x30] sm:$0xff] %vm1853, %v2212
        %2245 = vst.msk [vmem:[%s334 + $0x38] sm:$0xff] %vm1853, %v2213
        %2246 = vst.msk [vmem:[%s334 + $0x40] sm:$0xff] %vm1853, %v2214
        %2247 = vst.msk [vmem:[%s334 + $0x48] sm:$0xff] %vm1853, %v2215
        %2248 = vst.msk [vmem:[%s334 + $0x50] sm:$0xff] %vm1853, %v2216
        %2249 = vst.msk [vmem:[%s334 + $0x58] sm:$0xff] %vm1853, %v2217
        %2250 = vst.msk [vmem:[%s334 + $0x60] sm:$0xff] %vm1853, %v2218
        %2251 = vst.msk [vmem:[%s334 + $0x68] sm:$0xff] %vm1853, %v2219
        %2252 = vst.msk [vmem:[%s334 + $0x70] sm:$0xff] %vm1853, %v2220
        %2253 = vst.msk [vmem:[%s334 + $0x78] sm:$0xff] %vm1853, %v2221
        %2254 = vst.msk [vmem:[%s334 + $0x80] sm:$0xff] %vm1853, %v2222
        %2255 = vst.msk [vmem:[%s334 + $0x88] sm:$0xff] %vm1853, %v2223
        %2256 = vst.msk [vmem:[%s334 + $0x90] sm:$0xff] %vm1853, %v2224
        %2257 = vst.msk [vmem:[%s334 + $0x98] sm:$0xff] %vm1853, %v2225
        %2258 = vst.msk [vmem:[%s334 + $0xa0] sm:$0xff] %vm1853, %v2226
        %2259 = vst.msk [vmem:[%s334 + $0xa8] sm:$0xff] %vm1853, %v2227
        %2260 = vst.msk [vmem:[%s334 + $0xb0] sm:$0xff] %vm1853, %v2228
        %2261 = vst.msk [vmem:[%s334 + $0xb8] sm:$0xff] %vm1853, %v2229
        %2262 = vst.msk [vmem:[%s334 + $0xc0] sm:$0xff] %vm1853, %v2230
        %2263 = vst.msk [vmem:[%s334 + $0xc8] sm:$0xff] %vm1853, %v2231
        %2264 = vst.msk [vmem:[%s334 + $0xd0] sm:$0xff] %vm1853, %v2232
        %2265 = vst.msk [vmem:[%s334 + $0xd8] sm:$0xff] %vm1853, %v2233
        %2266 = vst.msk [vmem:[%s334 + $0xe0] sm:$0xff] %vm1853, %v2234
        %2267 = vst.msk [vmem:[%s334 + $0xe8] sm:$0xff] %vm1853, %v2235
        %2268 = vst.msk [vmem:[%s334 + $0xf0] sm:$0xff] %vm1853, %v2236
        %2269 = vst.msk [vmem:[%s334 + $0xf8] sm:$0xff] %vm1853, %v2237
        %s2270 = sand.u32 %s222, 1
        %s2271 = sand.u32 %s222, 1
        %s2272 = smul.addr %s2271, 256
        %s2273 = scalar_lea.vmem [#allocation2], %s2272
        // Predicated region
        $region57: #{tpu_custom_call.1} parent=55 // pred_check
          %p2274 = pneg %p232
        $region58: #{tpu_custom_call.1} parent=55 // pred_check_branch
          %2276 = sbr.rel (%p2274) target = $region60
        $region59: #{tpu_custom_call.1} parent=55 // pred_region
          %s2277 = smul.u32 32, %s20
          %s2278 = ssub.s32 38, %s2277
          %p2279 = scmp.lt.s32.totalorder %s2278, 32
          %s2280 = scalar_select %p2279, %s2278, 32
          %s2281 = smul.u32 128, %s2280
          %p2282 = scmp.ne.s32.totalorder 0, %s2281
          %s2283 = smul.addr %s2277, 8
          %s2284 = scalar_lea.vmem %s9, %s2283
          // Predicated region
          $region61: #{tpu_custom_call.1} parent=59 // pred_check
            %p2285 = pneg %p2282
          $region62: #{tpu_custom_call.1} parent=59 // pred_check_branch
            %2287 = sbr.rel (%p2285) target = $region64
          $region63: #{tpu_custom_call.1} parent=59 // pred_region
            // Predicated region
            $region65: #{tpu_custom_call.1} parent=63 // pred_check
              _
            $region66: #{tpu_custom_call.1} parent=63 // pred_check_branch
              %2289 = sbr.rel (0) target = $region68
            $region67: #{tpu_custom_call.1} parent=63 // pred_region
              // Predicated region
              $region87: #{tpu_custom_call.1} parent=67 // pred_check
                _
              $region88: #{tpu_custom_call.1} parent=67 // pred_check_branch
                %2400 = sbr.rel (0) target = $region90
              $region89: #{tpu_custom_call.1} parent=67 // pred_region
                %s2401 = sshrl.u32 %s2280, 5
                // While loop
                $region91: #{tpu_custom_call.1} parent=89 // loop_pre_header
                  _
                $region92: #{tpu_custom_call.1} parent=89 // loop_header
                  %s2403 = sphi 0, %s2405
                  %p2404 = scmp.ge.s32.totalorder %s2403, %s2401
                  %s2408 = sphi 0, %s2477
                  %s2409 = sphi %s2273, %s2480
                  %s2410 = sphi %s2284, %s2481
                $region93: #{tpu_custom_call.1} parent=89 // loop_header_branch
                  %2407 = sbr.rel (%p2404) target = $region97
                $region94: #{tpu_custom_call.1} parent=89 // loop_body
                  %v2411 = vld [vmem:[%s2409] sm:$0xff]
                  %2412 = vst [vmem:[%s2410] sm:$0xff] %v2411
                  %v2413 = vld [vmem:[%s2409 + $0x8] sm:$0xff]
                  %2414 = vst [vmem:[%s2410 + $0x8] sm:$0xff] %v2413
                  %v2415 = vld [vmem:[%s2409 + $0x10] sm:$0xff]
                  %2416 = vst [vmem:[%s2410 + $0x10] sm:$0xff] %v2415
                  %v2417 = vld [vmem:[%s2409 + $0x18] sm:$0xff]
                  %2418 = vst [vmem:[%s2410 + $0x18] sm:$0xff] %v2417
                  %v2419 = vld [vmem:[%s2409 + $0x20] sm:$0xff]
                  %2420 = vst [vmem:[%s2410 + $0x20] sm:$0xff] %v2419
                  %v2421 = vld [vmem:[%s2409 + $0x28] sm:$0xff]
                  %2422 = vst [vmem:[%s2410 + $0x28] sm:$0xff] %v2421
                  %v2423 = vld [vmem:[%s2409 + $0x30] sm:$0xff]
                  %2424 = vst [vmem:[%s2410 + $0x30] sm:$0xff] %v2423
                  %v2425 = vld [vmem:[%s2409 + $0x38] sm:$0xff]
                  %2426 = vst [vmem:[%s2410 + $0x38] sm:$0xff] %v2425
                  %v2427 = vld [vmem:[%s2409 + $0x40] sm:$0xff]
                  %2428 = vst [vmem:[%s2410 + $0x40] sm:$0xff] %v2427
                  %v2429 = vld [vmem:[%s2409 + $0x48] sm:$0xff]
                  %2430 = vst [vmem:[%s2410 + $0x48] sm:$0xff] %v2429
                  %v2431 = vld [vmem:[%s2409 + $0x50] sm:$0xff]
                  %2432 = vst [vmem:[%s2410 + $0x50] sm:$0xff] %v2431
                  %v2433 = vld [vmem:[%s2409 + $0x58] sm:$0xff]
                  %2434 = vst [vmem:[%s2410 + $0x58] sm:$0xff] %v2433
                  %v2435 = vld [vmem:[%s2409 + $0x60] sm:$0xff]
                  %2436 = vst [vmem:[%s2410 + $0x60] sm:$0xff] %v2435
                  %v2437 = vld [vmem:[%s2409 + $0x68] sm:$0xff]
                  %2438 = vst [vmem:[%s2410 + $0x68] sm:$0xff] %v2437
                  %v2439 = vld [vmem:[%s2409 + $0x70] sm:$0xff]
                  %2440 = vst [vmem:[%s2410 + $0x70] sm:$0xff] %v2439
                  %v2441 = vld [vmem:[%s2409 + $0x78] sm:$0xff]
                  %2442 = vst [vmem:[%s2410 + $0x78] sm:$0xff] %v2441
                  %v2443 = vld [vmem:[%s2409 + $0x80] sm:$0xff]
                  %2444 = vst [vmem:[%s2410 + $0x80] sm:$0xff] %v2443
                  %v2445 = vld [vmem:[%s2409 + $0x88] sm:$0xff]
                  %2446 = vst [vmem:[%s2410 + $0x88] sm:$0xff] %v2445
                  %v2447 = vld [vmem:[%s2409 + $0x90] sm:$0xff]
                  %2448 = vst [vmem:[%s2410 + $0x90] sm:$0xff] %v2447
                  %v2449 = vld [vmem:[%s2409 + $0x98] sm:$0xff]
                  %2450 = vst [vmem:[%s2410 + $0x98] sm:$0xff] %v2449
                  %v2451 = vld [vmem:[%s2409 + $0xa0] sm:$0xff]
                  %2452 = vst [vmem:[%s2410 + $0xa0] sm:$0xff] %v2451
                  %v2453 = vld [vmem:[%s2409 + $0xa8] sm:$0xff]
                  %2454 = vst [vmem:[%s2410 + $0xa8] sm:$0xff] %v2453
                  %v2455 = vld [vmem:[%s2409 + $0xb0] sm:$0xff]
                  %2456 = vst [vmem:[%s2410 + $0xb0] sm:$0xff] %v2455
                  %v2457 = vld [vmem:[%s2409 + $0xb8] sm:$0xff]
                  %2458 = vst [vmem:[%s2410 + $0xb8] sm:$0xff] %v2457
                  %v2459 = vld [vmem:[%s2409 + $0xc0] sm:$0xff]
                  %2460 = vst [vmem:[%s2410 + $0xc0] sm:$0xff] %v2459
                  %v2461 = vld [vmem:[%s2409 + $0xc8] sm:$0xff]
                  %2462 = vst [vmem:[%s2410 + $0xc8] sm:$0xff] %v2461
                  %v2463 = vld [vmem:[%s2409 + $0xd0] sm:$0xff]
                  %2464 = vst [vmem:[%s2410 + $0xd0] sm:$0xff] %v2463
                  %v2465 = vld [vmem:[%s2409 + $0xd8] sm:$0xff]
                  %2466 = vst [vmem:[%s2410 + $0xd8] sm:$0xff] %v2465
                  %v2467 = vld [vmem:[%s2409 + $0xe0] sm:$0xff]
                  %2468 = vst [vmem:[%s2410 + $0xe0] sm:$0xff] %v2467
                  %v2469 = vld [vmem:[%s2409 + $0xe8] sm:$0xff]
                  %2470 = vst [vmem:[%s2410 + $0xe8] sm:$0xff] %v2469
                  %v2471 = vld [vmem:[%s2409 + $0xf0] sm:$0xff]
                  %2472 = vst [vmem:[%s2410 + $0xf0] sm:$0xff] %v2471
                  %v2473 = vld [vmem:[%s2409 + $0xf8] sm:$0xff]
                  %2474 = vst [vmem:[%s2410 + $0xf8] sm:$0xff] %v2473
                  %s2475 = sadd.s32 1, %s2408
                  %p2476 = scmp.ge.s32.totalorder %s2475, %s2401
                  %s2477 = scalar_select %p2476, 0, %s2475
                  %s2478 = smul.u32 %s2477, 256
                  %s2479 = smul.u32 %s2477, 256
                  %s2480 = scalar_lea.vmem %s2273, %s2478 [#allocation2]
                  %s2481 = scalar_lea.vmem %s2284, %s2479
                $region95: #{tpu_custom_call.1} parent=89 // loop_footer
                  %s2405 = sadd.s32 %s2403, 1
                $region96: #{tpu_custom_call.1} parent=89 // loop_footer_branch
                  %2402 = sbr.rel target = $region92
                $region97: #{tpu_custom_call.1} parent=89 // loop_exit
                  _
                %s2482 = sshrl.u32 %s2280, 5
                %s2483 = sand.u32 %s2280, 31
                %s2484 = smul.u32 %s2482, 32
                %s2485 = smul.u32 8, %s2484
                %s2486 = scalar_lea.vmem %s2273, %s2485 [#allocation2]
                %s2487 = smul.u32 8, %s2484
                %s2488 = scalar_lea.vmem %s2284, %s2487
                // While loop
                $region98: #{tpu_custom_call.1} parent=89 // loop_pre_header
                  _
                $region99: #{tpu_custom_call.1} parent=89 // loop_header
                  %s2490 = sphi 0, %s2492
                  %p2491 = scmp.ge.s32.totalorder %s2490, %s2483
                  %s2495 = sphi 0, %s2502
                  %s2496 = sphi %s2486, %s2505
                  %s2497 = sphi %s2488, %s2506
                $region100: #{tpu_custom_call.1} parent=89 // loop_header_branch
                  %2494 = sbr.rel (%p2491) target = $region104
                $region101: #{tpu_custom_call.1} parent=89 // loop_body
                  %v2498 = vld [vmem:[%s2496] sm:$0xff]
                  %2499 = vst [vmem:[%s2497] sm:$0xff] %v2498
                  %s2500 = sadd.s32 1, %s2495
                  %p2501 = scmp.ge.s32.totalorder %s2500, %s2483
                  %s2502 = scalar_select %p2501, 0, %s2500
                  %s2503 = smul.u32 %s2502, 8
                  %s2504 = smul.u32 %s2502, 8
                  %s2505 = scalar_lea.vmem %s2486, %s2503 [#allocation2]
                  %s2506 = scalar_lea.vmem %s2488, %s2504
                $region102: #{tpu_custom_call.1} parent=89 // loop_footer
                  %s2492 = sadd.s32 %s2490, 1
                $region103: #{tpu_custom_call.1} parent=89 // loop_footer_branch
                  %2489 = sbr.rel target = $region99
                $region104: #{tpu_custom_call.1} parent=89 // loop_exit
                  _
              $region90: #{tpu_custom_call.1} parent=67 // pred_fallthru
                _
              // Predicated region
              $region105: #{tpu_custom_call.1} parent=67 // pred_check
                _
              $region106: #{tpu_custom_call.1} parent=67 // pred_check_branch
                %2508 = sbr.rel target = $region108
              $region107: #{tpu_custom_call.1} parent=67 // pred_region
                _
              $region108: #{tpu_custom_call.1} parent=67 // pred_fallthru
                _
            $region68: #{tpu_custom_call.1} parent=63 // pred_fallthru
              _
            // Predicated region
            $region69: #{tpu_custom_call.1} parent=63 // pred_check
              _
            $region70: #{tpu_custom_call.1} parent=63 // pred_check_branch
              %2291 = sbr.rel target = $region72
            $region71: #{tpu_custom_call.1} parent=63 // pred_region
              %s2293 = sshrl.u32 %s2280, 5
              // While loop
              $region73: #{tpu_custom_call.1} parent=71 // loop_pre_header
                _
              $region74: #{tpu_custom_call.1} parent=71 // loop_header
                %s2295 = sphi 0, %s2297
                %p2296 = scmp.ge.s32.totalorder %s2295, %s2293
                %s2300 = sphi 0, %s2369
                %s2301 = sphi %s2273, %s2372
                %s2302 = sphi %s2284, %s2373
              $region75: #{tpu_custom_call.1} parent=71 // loop_header_branch
                %2299 = sbr.rel (%p2296) target = $region79
              $region76: #{tpu_custom_call.1} parent=71 // loop_body
                %v2303 = vld [vmem:[%s2301] sm:$0xff]
                %2304 = vst [vmem:[%s2302] sm:$0xff] %v2303
                %v2305 = vld [vmem:[%s2301 + $0x8] sm:$0xff]
                %2306 = vst [vmem:[%s2302 + $0x8] sm:$0xff] %v2305
                %v2307 = vld [vmem:[%s2301 + $0x10] sm:$0xff]
                %2308 = vst [vmem:[%s2302 + $0x10] sm:$0xff] %v2307
                %v2309 = vld [vmem:[%s2301 + $0x18] sm:$0xff]
                %2310 = vst [vmem:[%s2302 + $0x18] sm:$0xff] %v2309
                %v2311 = vld [vmem:[%s2301 + $0x20] sm:$0xff]
                %2312 = vst [vmem:[%s2302 + $0x20] sm:$0xff] %v2311
                %v2313 = vld [vmem:[%s2301 + $0x28] sm:$0xff]
                %2314 = vst [vmem:[%s2302 + $0x28] sm:$0xff] %v2313
                %v2315 = vld [vmem:[%s2301 + $0x30] sm:$0xff]
                %2316 = vst [vmem:[%s2302 + $0x30] sm:$0xff] %v2315
                %v2317 = vld [vmem:[%s2301 + $0x38] sm:$0xff]
                %2318 = vst [vmem:[%s2302 + $0x38] sm:$0xff] %v2317
                %v2319 = vld [vmem:[%s2301 + $0x40] sm:$0xff]
                %2320 = vst [vmem:[%s2302 + $0x40] sm:$0xff] %v2319
                %v2321 = vld [vmem:[%s2301 + $0x48] sm:$0xff]
                %2322 = vst [vmem:[%s2302 + $0x48] sm:$0xff] %v2321
                %v2323 = vld [vmem:[%s2301 + $0x50] sm:$0xff]
                %2324 = vst [vmem:[%s2302 + $0x50] sm:$0xff] %v2323
                %v2325 = vld [vmem:[%s2301 + $0x58] sm:$0xff]
                %2326 = vst [vmem:[%s2302 + $0x58] sm:$0xff] %v2325
                %v2327 = vld [vmem:[%s2301 + $0x60] sm:$0xff]
                %2328 = vst [vmem:[%s2302 + $0x60] sm:$0xff] %v2327
                %v2329 = vld [vmem:[%s2301 + $0x68] sm:$0xff]
                %2330 = vst [vmem:[%s2302 + $0x68] sm:$0xff] %v2329
                %v2331 = vld [vmem:[%s2301 + $0x70] sm:$0xff]
                %2332 = vst [vmem:[%s2302 + $0x70] sm:$0xff] %v2331
                %v2333 = vld [vmem:[%s2301 + $0x78] sm:$0xff]
                %2334 = vst [vmem:[%s2302 + $0x78] sm:$0xff] %v2333
                %v2335 = vld [vmem:[%s2301 + $0x80] sm:$0xff]
                %2336 = vst [vmem:[%s2302 + $0x80] sm:$0xff] %v2335
                %v2337 = vld [vmem:[%s2301 + $0x88] sm:$0xff]
                %2338 = vst [vmem:[%s2302 + $0x88] sm:$0xff] %v2337
                %v2339 = vld [vmem:[%s2301 + $0x90] sm:$0xff]
                %2340 = vst [vmem:[%s2302 + $0x90] sm:$0xff] %v2339
                %v2341 = vld [vmem:[%s2301 + $0x98] sm:$0xff]
                %2342 = vst [vmem:[%s2302 + $0x98] sm:$0xff] %v2341
                %v2343 = vld [vmem:[%s2301 + $0xa0] sm:$0xff]
                %2344 = vst [vmem:[%s2302 + $0xa0] sm:$0xff] %v2343
                %v2345 = vld [vmem:[%s2301 + $0xa8] sm:$0xff]
                %2346 = vst [vmem:[%s2302 + $0xa8] sm:$0xff] %v2345
                %v2347 = vld [vmem:[%s2301 + $0xb0] sm:$0xff]
                %2348 = vst [vmem:[%s2302 + $0xb0] sm:$0xff] %v2347
                %v2349 = vld [vmem:[%s2301 + $0xb8] sm:$0xff]
                %2350 = vst [vmem:[%s2302 + $0xb8] sm:$0xff] %v2349
                %v2351 = vld [vmem:[%s2301 + $0xc0] sm:$0xff]
                %2352 = vst [vmem:[%s2302 + $0xc0] sm:$0xff] %v2351
                %v2353 = vld [vmem:[%s2301 + $0xc8] sm:$0xff]
                %2354 = vst [vmem:[%s2302 + $0xc8] sm:$0xff] %v2353
                %v2355 = vld [vmem:[%s2301 + $0xd0] sm:$0xff]
                %2356 = vst [vmem:[%s2302 + $0xd0] sm:$0xff] %v2355
                %v2357 = vld [vmem:[%s2301 + $0xd8] sm:$0xff]
                %2358 = vst [vmem:[%s2302 + $0xd8] sm:$0xff] %v2357
                %v2359 = vld [vmem:[%s2301 + $0xe0] sm:$0xff]
                %2360 = vst [vmem:[%s2302 + $0xe0] sm:$0xff] %v2359
                %v2361 = vld [vmem:[%s2301 + $0xe8] sm:$0xff]
                %2362 = vst [vmem:[%s2302 + $0xe8] sm:$0xff] %v2361
                %v2363 = vld [vmem:[%s2301 + $0xf0] sm:$0xff]
                %2364 = vst [vmem:[%s2302 + $0xf0] sm:$0xff] %v2363
                %v2365 = vld [vmem:[%s2301 + $0xf8] sm:$0xff]
                %2366 = vst [vmem:[%s2302 + $0xf8] sm:$0xff] %v2365
                %s2367 = sadd.s32 1, %s2300
                %p2368 = scmp.ge.s32.totalorder %s2367, %s2293
                %s2369 = scalar_select %p2368, 0, %s2367
                %s2370 = smul.u32 %s2369, 256
                %s2371 = smul.u32 %s2369, 256
                %s2372 = scalar_lea.vmem %s2273, %s2370 [#allocation2]
                %s2373 = scalar_lea.vmem %s2284, %s2371
              $region77: #{tpu_custom_call.1} parent=71 // loop_footer
                %s2297 = sadd.s32 %s2295, 1
              $region78: #{tpu_custom_call.1} parent=71 // loop_footer_branch
                %2294 = sbr.rel target = $region74
              $region79: #{tpu_custom_call.1} parent=71 // loop_exit
                _
              %s2374 = sshrl.u32 %s2280, 5
              %s2375 = sand.u32 %s2280, 31
              %s2376 = smul.u32 %s2374, 32
              %s2377 = smul.u32 8, %s2376
              %s2378 = scalar_lea.vmem %s2273, %s2377 [#allocation2]
              %s2379 = smul.u32 8, %s2376
              %s2380 = scalar_lea.vmem %s2284, %s2379
              // While loop
              $region80: #{tpu_custom_call.1} parent=71 // loop_pre_header
                _
              $region81: #{tpu_custom_call.1} parent=71 // loop_header
                %s2382 = sphi 0, %s2384
                %p2383 = scmp.ge.s32.totalorder %s2382, %s2375
                %s2387 = sphi 0, %s2394
                %s2388 = sphi %s2378, %s2397
                %s2389 = sphi %s2380, %s2398
              $region82: #{tpu_custom_call.1} parent=71 // loop_header_branch
                %2386 = sbr.rel (%p2383) target = $region86
              $region83: #{tpu_custom_call.1} parent=71 // loop_body
                %v2390 = vld [vmem:[%s2388] sm:$0xff]
                %2391 = vst [vmem:[%s2389] sm:$0xff] %v2390
                %s2392 = sadd.s32 1, %s2387
                %p2393 = scmp.ge.s32.totalorder %s2392, %s2375
                %s2394 = scalar_select %p2393, 0, %s2392
                %s2395 = smul.u32 %s2394, 8
                %s2396 = smul.u32 %s2394, 8
                %s2397 = scalar_lea.vmem %s2378, %s2395 [#allocation2]
                %s2398 = scalar_lea.vmem %s2380, %s2396
              $region84: #{tpu_custom_call.1} parent=71 // loop_footer
                %s2384 = sadd.s32 %s2382, 1
              $region85: #{tpu_custom_call.1} parent=71 // loop_footer_branch
                %2381 = sbr.rel target = $region81
              $region86: #{tpu_custom_call.1} parent=71 // loop_exit
                _
            $region72: #{tpu_custom_call.1} parent=63 // pred_fallthru
              _
          $region64: #{tpu_custom_call.1} parent=59 // pred_fallthru
            _
          %2509 = vnop
        $region60: #{tpu_custom_call.1} parent=55 // pred_fallthru
          _
      $region56: #{tpu_custom_call.1} parent=5 // pred_fallthru
        _
      %p2510 = scmp.le.s32.totalorder 2, %s15
      // Predicated region
      $region109: #{tpu_custom_call.1} parent=5 // pred_check
        %p2511 = pneg %p2510
      $region110: #{tpu_custom_call.1} parent=5 // pred_check_branch
        %2513 = sbr.rel (%p2511) target = $region112
      $region111: #{tpu_custom_call.1} parent=5 // pred_region
        %s2514 = ssub.s32 %s15, 2
        // Predicated region
        $region113: #{tpu_custom_call.1} parent=111 // pred_check
          %p2515 = pneg %p238
        $region114: #{tpu_custom_call.1} parent=111 // pred_check_branch
          %2517 = sbr.rel (%p2515) target = $region116
        $region115: #{tpu_custom_call.1} parent=111 // pred_region
          %s2518 = sand.u32 %s223, 1
          %s2519 = sand.u32 %s223, 1
          %s2520 = smul.addr %s2519, 256
          %s2521 = scalar_lea.vmem [#allocation2], %s2520
        $region116: #{tpu_custom_call.1} parent=111 // pred_fallthru
          _
      $region112: #{tpu_custom_call.1} parent=5 // pred_fallthru
        _
    $region6: #{tpu_custom_call.1} parent=1 // loop_footer
      %s19 = sadd.s32 1, %s15
    $region7: #{tpu_custom_call.1} parent=1 // loop_footer_branch
      %14 = sbr.rel target = $region3
    $region8: #{tpu_custom_call.1} parent=1 // loop_exit
      _

</llo_original>
